<compile_context>
chip_gen: v7x
topology: tpu7x:2x2x1
jax: 0.10.0
libtpu: 0.0.40
codegen_flags: <defaults>
</compile_context>

<pallas_src>
import functools

import jax
import jax.numpy as jnp
import numpy as np
from jax.experimental import pallas as pl
from jax.experimental.pallas import tpu as pltpu

EPS = 1e-5
NEG_SLOPE = 0.1
LANES = 128
SUBLANES = 8


def _round_up(x, m):
    return (x + m - 1) // m * m


def _vmem_info():
    """Per-generation VMEM working-set budget + scoped-vmem limit."""
    try:
        phys = int(pltpu.get_tpu_info().vmem_capacity_bytes)
    except Exception:
        phys = 64 * 1024 * 1024            # conservative fallback (v7x per-TC VMEM)
    budget = int(phys * 0.55)              # tile-sizing target
    limit = min(int(phys * 0.75), 100 * 1024 * 1024)   # ~48 MiB on v7x, ~96 MiB on v5e/v6e
    return budget, limit


def _pick_tile_h(ho, wo, k, cp, in_bytes, y_bytes, budget):
    """Largest tile_h dividing Ho with TM = tile_h*Wo 8-aligned and pass-1 set <= budget."""
    best = None
    for th in range(1, ho + 1):
        if ho % th:
            continue
        tm = th * wo
        if tm % SUBLANES and th != ho:
            continue
        work = (2 * tm * k * in_bytes        # main activation block (double-buffered)
                + 2 * wo * k * in_bytes      # halo row
                + tm * cp * 4                # f32 accumulator scratch
                + 2 * tm * cp * y_bytes      # conv-out block (double-buffered)
                + 2 * 8 * cp * 4)            # per-tile stats
        if work <= budget and (best is None or th > best):
            best = th
    return best if best is not None else ho
    # TODO(synk): also tile along Wo for very wide images so one row-chunk can't blow VMEM.


def _pick_row_block(m, target):
    """Largest 8-aligned divisor of m that is <= target (pass-2 elementwise tiling)."""
    if m % SUBLANES:
        return m
    best = SUBLANES
    for d in range(SUBLANES, min(m, max(target, SUBLANES)) + 1, SUBLANES):
        if m % d == 0:
            best = d
    return best


def _conv_stats_kernel(x_ref, h_ref, w_ref, y_ref, stats_ref, acc_ref, *, wo):
    """Pass 1: 3x3/s2 conv (3 contiguous MXU matmuls) + per-tile BN partial sums.

    x_ref:     (1, TM, K)     width-im2col activations, TM = tile_h*Wo, K = 6*Cin
    h_ref:     (1, 1, Wo, K)  one halo output-row (row-pair index tile_h) for this chunk
    w_ref:     (2, K, Cp)     [0] = taps kh in {0,1}, [1] = taps kh == 2
    y_ref:     (TM, Cp)       conv output tile (bf16 by default)
    stats_ref: (8, Cp)        row 0 = sum(y), row 1 = sum(y*y) over this tile (f32)
    acc_ref:   (TM, Cp) f32   VMEM accumulator (keeps MXU results out of the vreg file)
    """
    tm = acc_ref.shape[0]
    lo = tm - wo
    x = x_ref[0]                                             # (TM, K), contiguous

    # kh in {0,1}: taps live at row-pair oh -> one full-tile matmul.
    acc_ref[...] = jnp.dot(x, w_ref[0], preferred_element_type=jnp.float32)
    # kh == 2: taps live at row-pair oh+1 -> a contiguous Wo-row shift of the same block for
    # all but the last output row of the chunk, which reads the halo row instead.
    acc_ref[pl.ds(0, lo), :] += jnp.dot(
        x_ref[0, pl.ds(wo, lo), :], w_ref[1], preferred_element_type=jnp.float32)
    acc_ref[pl.ds(lo, wo), :] += jnp.dot(
        h_ref[0, 0], w_ref[1], preferred_element_type=jnp.float32)

    acc = acc_ref[...]                                        # f32
    y_ref[...] = acc.astype(y_ref.dtype)                      # bf16 intermediate (lane-dense)
    # BN partials from the f32 accumulator (before the bf16 cast); single (8, Cp) store.
    s1 = jnp.sum(acc, axis=0, keepdims=True)
    s2 = jnp.sum(acc * acc, axis=0, keepdims=True)
    row = jax.lax.broadcasted_iota(jnp.int32, (8, acc.shape[1]), 0)
    stats_ref[...] = jnp.where(row == 0, s1, jnp.where(row == 1, s2, 0.0))


def _bn_lrelu_kernel(y_ref, ss_ref, o_ref):
    """Pass 2: training-mode BN (gamma=1, beta=0) + LeakyReLU(0.1), math in f32."""
    y = y_ref[...].astype(jnp.float32)
    z = y * ss_ref[0:1, :] + ss_ref[1:2, :]
    o_ref[...] = jnp.where(z >= 0.0, z, NEG_SLOPE * z).astype(o_ref.dtype)


def downsampling_block(x_nchw, weight_oihw, *, compute_dtype=jnp.bfloat16,
                       out_dtype=jnp.float32, tile_h=None, nchw_output=True):
    """Forward of DownsamplingBlock.  x: (N, Cin, H, W), weight: (Cout, Cin, 3, 3)."""
    N, Cin, H, W = x_nchw.shape
    Cout = weight_oihw.shape[0]
    assert weight_oihw.shape == (Cout, Cin, 3, 3)
    assert H % 2 == 0 and W % 2 == 0, "DownsamplingBlock requires even spatial dims"
    Ho, Wo = H // 2, W // 2
    K = 6 * Cin

    # Lane-pad Cout only when the waste is small; otherwise use the real Cout
    # (a block's last dim may equal the full array dim -> still legal, masked stores).
    cp = _round_up(Cout, LANES)
    if cp != Cout and (cp - Cout) > 0.25 * Cout:
        cp = Cout

    in_bytes = jnp.dtype(compute_dtype).itemsize
    y_dtype = compute_dtype
    y_bytes = jnp.dtype(y_dtype).itemsize

    budget, vmem_limit = _vmem_info()
    weight_vmem = 2 * 2 * K * cp * in_bytes           # worst case: double-buffered weights
    act_budget = max(budget - weight_vmem, 4 * 1024 * 1024)
    if tile_h is None:
        tile_h = _pick_tile_h(Ho, Wo, K, cp, in_bytes, y_bytes, act_budget)
    assert Ho % tile_h == 0
    n_ch = Ho // tile_h
    TM = tile_h * Wo
    M = N * Ho * Wo
    T = N * n_ch
    assert TM % SUBLANES == 0 or TM == M, "tile rows must be 8-aligned for the (8,128) rule"

    # ---- wrapper glue: single fused width-im2col materialization (bf16) ----
    # Output column ow needs padded columns 2ow, 2ow+1, 2ow+2; those three column taps x the
    # two row parities are folded into channels (K = 6*Cin), so the kernel's shifted operands
    # are plain contiguous windows.  ~1.5x input elements, bf16, written + read once.
    # TODO(synk): keep the surrounding network NHWC / pre-im2col'ed so this folds into the
    # producing op entirely.
    x_nhwc = jnp.transpose(x_nchw, (0, 2, 3, 1)).astype(compute_dtype)    # (N, H, W, Cin)
    xp = jnp.pad(x_nhwc, ((0, 0), (1, 1), (1, 1), (0, 0)))                # (N, H+2, W+2, Cin)

    def _im2col(row_sel):
        parts = []
        for pr in (0, 1):                      # row parity (kh in {0,1} use pr=0/1 at oh)
            rows = xp[:, pr::2, :, :][:, row_sel]                          # (N, R, W+2, Cin)
            for t in (0, 1, 2):                # width tap kw
                parts.append(rows[:, :, t:t + 2 * Wo - 1:2, :])
        return jnp.concatenate(parts, axis=-1)                            # (N, R, Wo, 6*Cin)

    xw_main = _im2col(slice(0, Ho)).reshape(N, Ho * Wo, K)                 # row-pairs 0..Ho-1
    xw_halo = _im2col(slice(tile_h, Ho + 1, tile_h))                       # (N, n_ch, Wo, K)

    # Weight matrices: wm[0] holds the kh in {0,1} taps, wm[1] the kh == 2 taps (half zero).
    wt = jnp.transpose(weight_oihw, (2, 3, 1, 0)).astype(compute_dtype)    # (3, 3, Cin, Cout)
    wm = jnp.zeros((2, K, cp), compute_dtype)
    for kh in range(3):
        for kw in range(3):
            m = 1 if kh == 2 else 0
            g = (kh if kh < 2 else 0) * 3 + kw
            wm = wm.at[m, g * Cin:(g + 1) * Cin, :Cout].set(wt[kh, kw])

    # ---- pass 1: conv + per-tile BN partials ----
    kern1 = functools.partial(_conv_stats_kernel, wo=Wo)
    main_spec = pl.BlockSpec((1, TM, K), lambda n, c: (n, c, 0))
    halo_spec = pl.BlockSpec((1, 1, Wo, K), lambda n, c: (n, c, 0, 0))
    out_specs = [pl.BlockSpec((TM, cp), lambda n, c: (n * n_ch + c, 0)),
                 pl.BlockSpec((8, cp), lambda n, c: (n * n_ch + c, 0))]
    out_shapes = [jax.ShapeDtypeStruct((M, cp), y_dtype),
                  jax.ShapeDtypeStruct((T * 8, cp), jnp.float32)]
    cparams = pltpu.CompilerParams(dimension_semantics=("parallel", "parallel"),
                                   vmem_limit_bytes=vmem_limit)

    def _run_pass1(w_spec):
        return pl.pallas_call(
            kern1,
            grid=(N, n_ch),
            in_specs=[main_spec, halo_spec, w_spec],
            out_specs=out_specs,
            out_shape=out_shapes,
            scratch_shapes=[pltpu.VMEM((TM, cp), jnp.float32)],
            compiler_params=cparams,
        )(xw_main, xw_halo, wm)

    try:
        # Resident (grid-invariant) weights single-buffered so the pipeline doesn't keep a
        # duplicate copy -- matters for the v7x 64 MiB VMEM budget.
        y_flat, stats = _run_pass1(
            pl.BlockSpec((2, K, cp), lambda n, c: (0, 0, 0), pipeline_mode=pl.Buffered(1)))
    except Exception:
        # TODO(synk): some jax versions reject single-buffered pipeline_mode here; fall back
        # to the default double-buffered resident weights (they are bf16, so small).
        y_flat, stats = _run_pass1(pl.BlockSpec((2, K, cp), lambda n, c: (0, 0, 0)))

    # ---- tiny global reduction of the per-tile partials (plain JAX, O(T*Cp)) ----
    st = stats.reshape(T, 8, cp)
    s1 = jnp.sum(st[:, 0, :], axis=0)
    s2 = jnp.sum(st[:, 1, :], axis=0)
    mean = s1 / M
    # One-pass variance in f32; clamp guards tiny negatives.  Fine for post-init conv outputs.
    var = jnp.maximum(s2 / M - mean * mean, 0.0)
    scale = jax.lax.rsqrt(var + EPS)               # gamma = 1
    shift = -mean * scale                          # beta  = 0
    ss = jnp.zeros((8, cp), jnp.float32).at[0].set(scale).at[1].set(shift)

    # ---- pass 2: normalize + LeakyReLU over big lane-dense blocks (decoupled from TM) ----
    r_target = max(SUBLANES, min(2048, budget // max(1, 3 * cp * (y_bytes + 4))))
    r_blk = _pick_row_block(M, r_target)
    out_flat = pl.pallas_call(
        _bn_lrelu_kernel,
        grid=(M // r_blk,),
        in_specs=[pl.BlockSpec((r_blk, cp), lambda i: (i, 0)),
                  pl.BlockSpec((8, cp), lambda i: (0, 0))],
        out_specs=pl.BlockSpec((r_blk, cp), lambda i: (i, 0)),
        out_shape=jax.ShapeDtypeStruct((M, cp), out_dtype),
        compiler_params=pltpu.CompilerParams(dimension_semantics=("parallel",),
                                             vmem_limit_bytes=vmem_limit),
    )(y_flat, ss)
    # TODO(synk): when out_dtype == y dtype, alias y_flat to the output
    # (input_output_aliases) to cut the peak HBM footprint.

    out = out_flat.reshape(N, Ho, Wo, cp)[..., :Cout]
    if nchw_output:
        # TODO(synk): this NHWC->NCHW transpose is a full HBM pass kept only for PyTorch
        # layout fidelity; prefer nchw_output=False (channels-last end-to-end), or fold the
        # transpose into pass 2's out_spec when Wo is large enough to stay lane-dense.
        out = jnp.transpose(out, (0, 3, 1, 2))
        assert out.shape[2] == H // 2 and out.shape[3] == W // 2
    return out


def _reference(x_nchw, weight_oihw):
    """Pure-JAX reference: lax conv + train-mode batchnorm + leaky relu (NCHW, f32)."""
    y = jax.lax.conv_general_dilated(
        x_nchw.astype(jnp.float32), weight_oihw.astype(jnp.float32),
        window_strides=(2, 2), padding=((1, 1), (1, 1)),
        dimension_numbers=("NCHW", "OIHW", "NCHW"))
    mean = jnp.mean(y, axis=(0, 2, 3), keepdims=True)
    var = jnp.mean((y - mean) ** 2, axis=(0, 2, 3), keepdims=True)
    z = (y - mean) * jax.lax.rsqrt(var + EPS)
    return jnp.where(z >= 0.0, z, NEG_SLOPE * z)


if __name__ == "__main__":
    key = jax.random.PRNGKey(0)
    kx, kw = jax.random.split(key)

    N, Cin, Cout, H, W = 2, 4, 8, 16, 16
    x = jax.random.normal(kx, (N, Cin, H, W), dtype=jnp.float32)
    bound = 1.0 / np.sqrt(Cin * 3 * 3)
    weight = jax.random.uniform(kw, (Cout, Cin, 3, 3), minval=-bound, maxval=bound,
                                dtype=jnp.float32)

    ref = jax.block_until_ready(_reference(x, weight))

    # f32 operands, explicit tile_h=4: exercises the multi-chunk grid (2x2), the halo path
    # and the global two-phase BN with a tight tolerance.
    out_f32 = jax.block_until_ready(
        downsampling_block(x, weight, compute_dtype=jnp.float32, tile_h=4))
    np.testing.assert_allclose(np.asarray(out_f32), np.asarray(ref), atol=1e-4, rtol=1e-4)

    # Default fast path: bf16 matmul operands + bf16 conv intermediate, auto tile sizing.
    out_bf16 = jax.block_until_ready(downsampling_block(x, weight))
    np.testing.assert_allclose(np.asarray(out_bf16), np.asarray(ref), atol=1e-1, rtol=1e-1)

    print("KERNEL_OK")
</pallas_src>

<mosaic_0001>
module attributes {stable_mosaic.version = 11 : i64} {
  func.func @_conv_stats_kernel(%arg0: i32, %arg1: i32, %arg2: memref<1x32x24xf32, #tpu.memory_space<vmem>>, %arg3: memref<1x1x8x24xf32, #tpu.memory_space<vmem>>, %arg4: memref<2x24x8xf32, #tpu.memory_space<vmem>>, %arg5: memref<32x8xf32, #tpu.memory_space<vmem>>, %arg6: memref<8x8xf32, #tpu.memory_space<vmem>>, %arg7: memref<32x8xf32, #tpu.memory_space<vmem>>) attributes {dimension_semantics = [#tpu.dimension_semantics<parallel>, #tpu.dimension_semantics<parallel>], iteration_bounds = array<i64: 2, 2>, scalar_prefetch = 0 : i64, scratch_operands = 1 : i64, tpu.core_type = #tpu.core_type<tc>, window_params = [{transform_indices = @transform_0, window_bounds = array<i64: 1, 32, 24>}, {transform_indices = @transform_1, window_bounds = array<i64: 1, 1, 8, 24>}, {pipeline_mode = #tpu.pipeline_mode<synchronous>, transform_indices = @transform_2, window_bounds = array<i64: 2, 24, 8>}, {transform_indices = @transform_3, window_bounds = array<i64: 32, 8>}, {transform_indices = @transform_4, window_bounds = array<i64: 8, 8>}]} {
    %c0 = arith.constant 0 : index
    %c0_0 = arith.constant 0 : index
    %c0_1 = arith.constant 0 : index
    %0 = vector.load %arg2[%c0, %c0_0, %c0_1] : memref<1x32x24xf32, #tpu.memory_space<vmem>>, vector<1x32x24xf32>
    %1 = vector.shape_cast %0 : vector<1x32x24xf32> to vector<32x24xf32>
    %c0_2 = arith.constant 0 : index
    %c0_3 = arith.constant 0 : index
    %c0_4 = arith.constant 0 : index
    %2 = vector.load %arg4[%c0_2, %c0_3, %c0_4] : memref<2x24x8xf32, #tpu.memory_space<vmem>>, vector<1x24x8xf32>
    %3 = vector.shape_cast %2 : vector<1x24x8xf32> to vector<24x8xf32>
    %cst = arith.constant dense<0.000000e+00> : vector<32x8xf32>
    %4 = tpu.matmul %1, %3, %cst {dimension_numbers = #tpu.dot_dimension_numbers<[1], [0], [0], [1], [0, 0, 1, 1], [], []>} : vector<32x24xf32>, vector<24x8xf32>, vector<32x8xf32> -> vector<32x8xf32>
    %c0_5 = arith.constant 0 : index
    %c0_6 = arith.constant 0 : index
    %5 = vector.load %arg7[%c0_5, %c0_6] : memref<32x8xf32, #tpu.memory_space<vmem>>, vector<32x8xf32>
    tpu.vector_store %arg7[%c0_5, %c0_6], %4 {strides = array<i32>} : memref<32x8xf32, #tpu.memory_space<vmem>>, vector<32x8xf32>,
    %c0_7 = arith.constant 0 : index
    %c0_8 = arith.constant 0 : index
    %6 = vector.load %arg7[%c0_7, %c0_8] : memref<32x8xf32, #tpu.memory_space<vmem>>, vector<24x8xf32>
    %c0_9 = arith.constant 0 : index
    %c8 = arith.constant 8 : index
    %c0_10 = arith.constant 0 : index
    %7 = vector.load %arg2[%c0_9, %c8, %c0_10] : memref<1x32x24xf32, #tpu.memory_space<vmem>>, vector<1x24x24xf32>
    %8 = vector.shape_cast %7 : vector<1x24x24xf32> to vector<24x24xf32>
    %c1 = arith.constant 1 : index
    %c0_11 = arith.constant 0 : index
    %c0_12 = arith.constant 0 : index
    %9 = vector.load %arg4[%c1, %c0_11, %c0_12] : memref<2x24x8xf32, #tpu.memory_space<vmem>>, vector<1x24x8xf32>
    %10 = vector.shape_cast %9 : vector<1x24x8xf32> to vector<24x8xf32>
    %cst_13 = arith.constant dense<0.000000e+00> : vector<24x8xf32>
    %11 = tpu.matmul %8, %10, %cst_13 {dimension_numbers = #tpu.dot_dimension_numbers<[1], [0], [0], [1], [0, 0, 1, 1], [], []>} : vector<24x24xf32>, vector<24x8xf32>, vector<24x8xf32> -> vector<24x8xf32>
    %12 = arith.addf %6, %11 : vector<24x8xf32>
    %c0_14 = arith.constant 0 : index
    %c0_15 = arith.constant 0 : index
    %13 = vector.load %arg7[%c0_14, %c0_15] : memref<32x8xf32, #tpu.memory_space<vmem>>, vector<24x8xf32>
    tpu.vector_store %arg7[%c0_14, %c0_15], %12 {strides = array<i32>} : memref<32x8xf32, #tpu.memory_space<vmem>>, vector<24x8xf32>,
    %c24 = arith.constant 24 : index
    %c0_16 = arith.constant 0 : index
    %14 = vector.load %arg7[%c24, %c0_16] : memref<32x8xf32, #tpu.memory_space<vmem>>, vector<8x8xf32>
    %c0_17 = arith.constant 0 : index
    %c0_18 = arith.constant 0 : index
    %c0_19 = arith.constant 0 : index
    %c0_20 = arith.constant 0 : index
    %15 = vector.load %arg3[%c0_17, %c0_18, %c0_19, %c0_20] : memref<1x1x8x24xf32, #tpu.memory_space<vmem>>, vector<1x1x8x24xf32>
    %16 = vector.shape_cast %15 : vector<1x1x8x24xf32> to vector<8x24xf32>
    %c1_21 = arith.constant 1 : index
    %c0_22 = arith.constant 0 : index
    %c0_23 = arith.constant 0 : index
    %17 = vector.load %arg4[%c1_21, %c0_22, %c0_23] : memref<2x24x8xf32, #tpu.memory_space<vmem>>, vector<1x24x8xf32>
    %18 = vector.shape_cast %17 : vector<1x24x8xf32> to vector<24x8xf32>
    %cst_24 = arith.constant dense<0.000000e+00> : vector<8x8xf32>
    %19 = tpu.matmul %16, %18, %cst_24 {dimension_numbers = #tpu.dot_dimension_numbers<[1], [0], [0], [1], [0, 0, 1, 1], [], []>} : vector<8x24xf32>, vector<24x8xf32>, vector<8x8xf32> -> vector<8x8xf32>
    %20 = arith.addf %14, %19 : vector<8x8xf32>
    %c24_25 = arith.constant 24 : index
    %c0_26 = arith.constant 0 : index
    %21 = vector.load %arg7[%c24_25, %c0_26] : memref<32x8xf32, #tpu.memory_space<vmem>>, vector<8x8xf32>
    tpu.vector_store %arg7[%c24_25, %c0_26], %20 {strides = array<i32>} : memref<32x8xf32, #tpu.memory_space<vmem>>, vector<8x8xf32>,
    %c0_27 = arith.constant 0 : index
    %c0_28 = arith.constant 0 : index
    %22 = vector.load %arg7[%c0_27, %c0_28] : memref<32x8xf32, #tpu.memory_space<vmem>>, vector<32x8xf32>
    %c0_29 = arith.constant 0 : index
    %c0_30 = arith.constant 0 : index
    %23 = vector.load %arg5[%c0_29, %c0_30] : memref<32x8xf32, #tpu.memory_space<vmem>>, vector<32x8xf32>
    tpu.vector_store %arg5[%c0_29, %c0_30], %22 {strides = array<i32>} : memref<32x8xf32, #tpu.memory_space<vmem>>, vector<32x8xf32>,
    %cst_31 = arith.constant dense<0.000000e+00> : vector<8xf32>
    %24 = vector.multi_reduction <add>, %22, %cst_31 [0] : vector<32x8xf32> to vector<8xf32>
    %25 = vector.shape_cast %24 : vector<8xf32> to vector<1x8xf32>
    %26 = arith.mulf %22, %22 : vector<32x8xf32>
    %cst_32 = arith.constant dense<0.000000e+00> : vector<8xf32>
    %27 = vector.multi_reduction <add>, %26, %cst_32 [0] : vector<32x8xf32> to vector<8xf32>
    %28 = vector.shape_cast %27 : vector<8xf32> to vector<1x8xf32>
    %29 = tpu.iota {dimensions = array<i32: 0>} : vector<8x8xi32>
    %c0_i32 = arith.constant 0 : i32
    %30 = vector.broadcast %c0_i32 : i32 to vector<8x8xi32>
    %31 = arith.cmpi eq, %29, %30 : vector<8x8xi32>
    %c1_i32 = arith.constant 1 : i32
    %32 = vector.broadcast %c1_i32 : i32 to vector<8x8xi32>
    %33 = arith.cmpi eq, %29, %32 : vector<8x8xi32>
    %cst_33 = arith.constant 0.000000e+00 : f32
    %34 = vector.shape_cast %28 : vector<1x8xf32> to vector<1x8xf32>
    %35 = vector.broadcast %34 : vector<1x8xf32> to vector<8x8xf32>
    %36 = vector.broadcast %cst_33 : f32 to vector<8x8xf32>
    %37 = arith.select %33, %35, %36 : vector<8x8xi1>, vector<8x8xf32>
    %38 = vector.shape_cast %25 : vector<1x8xf32> to vector<1x8xf32>
    %39 = vector.broadcast %38 : vector<1x8xf32> to vector<8x8xf32>
    %40 = arith.select %31, %39, %37 : vector<8x8xi1>, vector<8x8xf32>
    %c0_34 = arith.constant 0 : index
    %c0_35 = arith.constant 0 : index
    %41 = vector.load %arg6[%c0_34, %c0_35] : memref<8x8xf32, #tpu.memory_space<vmem>>, vector<8x8xf32>
    tpu.vector_store %arg6[%c0_34, %c0_35], %40 {strides = array<i32>} : memref<8x8xf32, #tpu.memory_space<vmem>>, vector<8x8xf32>,
    return
  }
  func.func @transform_0(%arg0: i32, %arg1: i32) -> (i32, i32, i32) {
    %c0_i32 = arith.constant 0 : i32
    %c0_i32_0 = arith.constant 0 : i32
    return %arg0, %arg1, %c0_i32 : i32, i32, i32
  }
  func.func @transform_1(%arg0: i32, %arg1: i32) -> (i32, i32, i32, i32) {
    %c0_i32 = arith.constant 0 : i32
    %c0_i32_0 = arith.constant 0 : i32
    %c0_i32_1 = arith.constant 0 : i32
    return %arg0, %arg1, %c0_i32, %c0_i32_0 : i32, i32, i32, i32
  }
  func.func @transform_2(%arg0: i32, %arg1: i32) -> (i32, i32, i32) {
    %c0_i32 = arith.constant 0 : i32
    %c0_i32_0 = arith.constant 0 : i32
    %c0_i32_1 = arith.constant 0 : i32
    %c0_i32_2 = arith.constant 0 : i32
    return %c0_i32, %c0_i32_0, %c0_i32_1 : i32, i32, i32
  }
  func.func @transform_3(%arg0: i32, %arg1: i32) -> (i32, i32) {
    %c2_i32 = arith.constant 2 : i32
    %0 = arith.muli %arg0, %c2_i32 : i32
    %1 = arith.addi %0, %arg1 : i32
    %c0_i32 = arith.constant 0 : i32
    %c0_i32_0 = arith.constant 0 : i32
    return %1, %c0_i32 : i32, i32
  }
  func.func @transform_4(%arg0: i32, %arg1: i32) -> (i32, i32) {
    %c2_i32 = arith.constant 2 : i32
    %0 = arith.muli %arg0, %c2_i32 : i32
    %1 = arith.addi %0, %arg1 : i32
    %c0_i32 = arith.constant 0 : i32
    %c0_i32_0 = arith.constant 0 : i32
    return %1, %c0_i32 : i32, i32
  }
}

module attributes {stable_mosaic.version = 11 : i64} {
  func.func @_conv_stats_kernel(%arg0: i32, %arg1: i32, %arg2: memref<1x32x24xf32, #tpu.memory_space<vmem>>, %arg3: memref<1x1x8x24xf32, #tpu.memory_space<vmem>>, %arg4: memref<2x24x8xf32, #tpu.memory_space<vmem>>, %arg5: memref<32x8xf32, #tpu.memory_space<vmem>>, %arg6: memref<8x8xf32, #tpu.memory_space<vmem>>, %arg7: memref<32x8xf32, #tpu.memory_space<vmem>>) attributes {dimension_semantics = [#tpu.dimension_semantics<parallel>, #tpu.dimension_semantics<parallel>], iteration_bounds = array<i64: 2, 2>, scalar_prefetch = 0 : i64, scratch_operands = 1 : i64, tpu.core_type = #tpu.core_type<tc>, window_params = [{transform_indices = @transform_0, window_bounds = array<i64: 1, 32, 24>}, {transform_indices = @transform_1, window_bounds = array<i64: 1, 1, 8, 24>}, {pipeline_mode = #tpu.pipeline_mode<synchronous>, transform_indices = @transform_2, window_bounds = array<i64: 2, 24, 8>}, {transform_indices = @transform_3, window_bounds = array<i64: 32, 8>}, {transform_indices = @transform_4, window_bounds = array<i64: 8, 8>}]} {
    %c0 = arith.constant 0 : index
    %c0_0 = arith.constant 0 : index
    %c0_1 = arith.constant 0 : index
    %0 = vector.load %arg2[%c0, %c0_0, %c0_1] : memref<1x32x24xf32, #tpu.memory_space<vmem>>, vector<1x32x24xf32>
    %1 = vector.shape_cast %0 : vector<1x32x24xf32> to vector<32x24xf32>
    %c0_2 = arith.constant 0 : index
    %c0_3 = arith.constant 0 : index
    %c0_4 = arith.constant 0 : index
    %2 = vector.load %arg4[%c0_2, %c0_3, %c0_4] : memref<2x24x8xf32, #tpu.memory_space<vmem>>, vector<1x24x8xf32>
    %3 = vector.shape_cast %2 : vector<1x24x8xf32> to vector<24x8xf32>
    %cst = arith.constant dense<0.000000e+00> : vector<32x8xf32>
    %4 = tpu.matmul %1, %3, %cst {dimension_numbers = #tpu.dot_dimension_numbers<[1], [0], [0], [1], [0, 0, 1, 1], [], []>} : vector<32x24xf32>, vector<24x8xf32>, vector<32x8xf32> -> vector<32x8xf32>
    %c0_5 = arith.constant 0 : index
    %c0_6 = arith.constant 0 : index
    %5 = vector.load %arg7[%c0_5, %c0_6] : memref<32x8xf32, #tpu.memory_space<vmem>>, vector<32x8xf32>
    tpu.vector_store %arg7[%c0_5, %c0_6], %4 {strides = array<i32>} : memref<32x8xf32, #tpu.memory_space<vmem>>, vector<32x8xf32>,
    %c0_7 = arith.constant 0 : index
    %c0_8 = arith.constant 0 : index
    %6 = vector.load %arg7[%c0_7, %c0_8] : memref<32x8xf32, #tpu.memory_space<vmem>>, vector<24x8xf32>
    %c0_9 = arith.constant 0 : index
    %c8 = arith.constant 8 : index
    %c0_10 = arith.constant 0 : index
    %7 = vector.load %arg2[%c0_9, %c8, %c0_10] : memref<1x32x24xf32, #tpu.memory_space<vmem>>, vector<1x24x24xf32>
    %8 = vector.shape_cast %7 : vector<1x24x24xf32> to vector<24x24xf32>
    %c1 = arith.constant 1 : index
    %c0_11 = arith.constant 0 : index
    %c0_12 = arith.constant 0 : index
    %9 = vector.load %arg4[%c1, %c0_11, %c0_12] : memref<2x24x8xf32, #tpu.memory_space<vmem>>, vector<1x24x8xf32>
    %10 = vector.shape_cast %9 : vector<1x24x8xf32> to vector<24x8xf32>
    %cst_13 = arith.constant dense<0.000000e+00> : vector<24x8xf32>
    %11 = tpu.matmul %8, %10, %cst_13 {dimension_numbers = #tpu.dot_dimension_numbers<[1], [0], [0], [1], [0, 0, 1, 1], [], []>} : vector<24x24xf32>, vector<24x8xf32>, vector<24x8xf32> -> vector<24x8xf32>
    %12 = arith.addf %6, %11 : vector<24x8xf32>
    %c0_14 = arith.constant 0 : index
    %c0_15 = arith.constant 0 : index
    %13 = vector.load %arg7[%c0_14, %c0_15] : memref<32x8xf32, #tpu.memory_space<vmem>>, vector<24x8xf32>
    tpu.vector_store %arg7[%c0_14, %c0_15], %12 {strides = array<i32>} : memref<32x8xf32, #tpu.memory_space<vmem>>, vector<24x8xf32>,
    %c24 = arith.constant 24 : index
    %c0_16 = arith.constant 0 : index
    %14 = vector.load %arg7[%c24, %c0_16] : memref<32x8xf32, #tpu.memory_space<vmem>>, vector<8x8xf32>
    %c0_17 = arith.constant 0 : index
    %c0_18 = arith.constant 0 : index
    %c0_19 = arith.constant 0 : index
    %c0_20 = arith.constant 0 : index
    %15 = vector.load %arg3[%c0_17, %c0_18, %c0_19, %c0_20] : memref<1x1x8x24xf32, #tpu.memory_space<vmem>>, vector<1x1x8x24xf32>
    %16 = vector.shape_cast %15 : vector<1x1x8x24xf32> to vector<8x24xf32>
    %c1_21 = arith.constant 1 : index
    %c0_22 = arith.constant 0 : index
    %c0_23 = arith.constant 0 : index
    %17 = vector.load %arg4[%c1_21, %c0_22, %c0_23] : memref<2x24x8xf32, #tpu.memory_space<vmem>>, vector<1x24x8xf32>
    %18 = vector.shape_cast %17 : vector<1x24x8xf32> to vector<24x8xf32>
    %cst_24 = arith.constant dense<0.000000e+00> : vector<8x8xf32>
    %19 = tpu.matmul %16, %18, %cst_24 {dimension_numbers = #tpu.dot_dimension_numbers<[1], [0], [0], [1], [0, 0, 1, 1], [], []>} : vector<8x24xf32>, vector<24x8xf32>, vector<8x8xf32> -> vector<8x8xf32>
    %20 = arith.addf %14, %19 : vector<8x8xf32>
    %c24_25 = arith.constant 24 : index
    %c0_26 = arith.constant 0 : index
    %21 = vector.load %arg7[%c24_25, %c0_26] : memref<32x8xf32, #tpu.memory_space<vmem>>, vector<8x8xf32>
    tpu.vector_store %arg7[%c24_25, %c0_26], %20 {strides = array<i32>} : memref<32x8xf32, #tpu.memory_space<vmem>>, vector<8x8xf32>,
    %c0_27 = arith.constant 0 : index
    %c0_28 = arith.constant 0 : index
    %22 = vector.load %arg7[%c0_27, %c0_28] : memref<32x8xf32, #tpu.memory_space<vmem>>, vector<32x8xf32>
    %c0_29 = arith.constant 0 : index
    %c0_30 = arith.constant 0 : index
    %23 = vector.load %arg5[%c0_29, %c0_30] : memref<32x8xf32, #tpu.memory_space<vmem>>, vector<32x8xf32>
    tpu.vector_store %arg5[%c0_29, %c0_30], %22 {strides = array<i32>} : memref<32x8xf32, #tpu.memory_space<vmem>>, vector<32x8xf32>,
    %cst_31 = arith.constant dense<0.000000e+00> : vector<8xf32>
    %24 = vector.multi_reduction <add>, %22, %cst_31 [0] : vector<32x8xf32> to vector<8xf32>
    %25 = vector.shape_cast %24 : vector<8xf32> to vector<1x8xf32>
    %26 = arith.mulf %22, %22 : vector<32x8xf32>
    %cst_32 = arith.constant dense<0.000000e+00> : vector<8xf32>
    %27 = vector.multi_reduction <add>, %26, %cst_32 [0] : vector<32x8xf32> to vector<8xf32>
    %28 = vector.shape_cast %27 : vector<8xf32> to vector<1x8xf32>
    %29 = tpu.iota {dimensions = array<i32: 0>} : vector<8x8xi32>
    %c0_i32 = arith.constant 0 : i32
    %30 = vector.broadcast %c0_i32 : i32 to vector<8x8xi32>
    %31 = arith.cmpi eq, %29, %30 : vector<8x8xi32>
    %c1_i32 = arith.constant 1 : i32
    %32 = vector.broadcast %c1_i32 : i32 to vector<8x8xi32>
    %33 = arith.cmpi eq, %29, %32 : vector<8x8xi32>
    %cst_33 = arith.constant 0.000000e+00 : f32
    %34 = vector.shape_cast %28 : vector<1x8xf32> to vector<1x8xf32>
    %35 = vector.broadcast %34 : vector<1x8xf32> to vector<8x8xf32>
    %36 = vector.broadcast %cst_33 : f32 to vector<8x8xf32>
    %37 = arith.select %33, %35, %36 : vector<8x8xi1>, vector<8x8xf32>
    %38 = vector.shape_cast %25 : vector<1x8xf32> to vector<1x8xf32>
    %39 = vector.broadcast %38 : vector<1x8xf32> to vector<8x8xf32>
    %40 = arith.select %31, %39, %37 : vector<8x8xi1>, vector<8x8xf32>
    %c0_34 = arith.constant 0 : index
    %c0_35 = arith.constant 0 : index
    %41 = vector.load %arg6[%c0_34, %c0_35] : memref<8x8xf32, #tpu.memory_space<vmem>>, vector<8x8xf32>
    tpu.vector_store %arg6[%c0_34, %c0_35], %40 {strides = array<i32>} : memref<8x8xf32, #tpu.memory_space<vmem>>, vector<8x8xf32>,
    return
  }
  func.func @transform_0(%arg0: i32, %arg1: i32) -> (i32, i32, i32) {
    %c0_i32 = arith.constant 0 : i32
    %c0_i32_0 = arith.constant 0 : i32
    return %arg0, %arg1, %c0_i32 : i32, i32, i32
  }
  func.func @transform_1(%arg0: i32, %arg1: i32) -> (i32, i32, i32, i32) {
    %c0_i32 = arith.constant 0 : i32
    %c0_i32_0 = arith.constant 0 : i32
    %c0_i32_1 = arith.constant 0 : i32
    return %arg0, %arg1, %c0_i32, %c0_i32_0 : i32, i32, i32, i32
  }
  func.func @transform_2(%arg0: i32, %arg1: i32) -> (i32, i32, i32) {
    %c0_i32 = arith.constant 0 : i32
    %c0_i32_0 = arith.constant 0 : i32
    %c0_i32_1 = arith.constant 0 : i32
    %c0_i32_2 = arith.constant 0 : i32
    return %c0_i32, %c0_i32_0, %c0_i32_1 : i32, i32, i32
  }
  func.func @transform_3(%arg0: i32, %arg1: i32) -> (i32, i32) {
    %c2_i32 = arith.constant 2 : i32
    %0 = arith.muli %arg0, %c2_i32 : i32
    %1 = arith.addi %0, %arg1 : i32
    %c0_i32 = arith.constant 0 : i32
    %c0_i32_0 = arith.constant 0 : i32
    return %1, %c0_i32 : i32, i32
  }
  func.func @transform_4(%arg0: i32, %arg1: i32) -> (i32, i32) {
    %c2_i32 = arith.constant 2 : i32
    %0 = arith.muli %arg0, %c2_i32 : i32
    %1 = arith.addi %0, %arg1 : i32
    %c0_i32 = arith.constant 0 : i32
    %c0_i32_0 = arith.constant 0 : i32
    return %1, %c0_i32 : i32, i32
  }
}

</mosaic_0001>

<llo_original>
// kernel: tpu_custom_call.1
$region0: #{tpu_custom_call.1}
  #allocation0 [shape = 'u32[]', space=smem, size = 0x4, offset = 0x4, fixed_abs, tag = 'smem constant byte address 0x4 - core index']
  #allocation1 [shape = 'u32[144,128]{1,0:T(1,128)}', space=vmem, size = 0x12000, scoped, tag = 'internal scratch']
  #allocation2 [shape = 'f32[32,8]{1,0:T(8,128)}', space=vmem, size = 0x4000, scoped, tag = 'scratch operand']
  %s0 = inlined_call_operand.vmem [shape: f32[2,64,24], index: 0, kind: input, shape index: {}]
  %s1 = inlined_call_operand.vmem [shape: f32[2,2,8,24], index: 1, kind: input, shape index: {}]
  %s2 = inlined_call_operand.vmem [shape: f32[2,24,8], index: 2, kind: input, shape index: {}]
  %s3 = inlined_call_operand.vmem [shape: f32[128,8], index: 3, kind: output, shape index: {0}]
  %s4 = inlined_call_operand.vmem [shape: f32[32,8], index: 4, kind: output, shape index: {1}]
  %5 = xla_tuple %s3, %s4
  %s6 = sld [smem:[#allocation0]]
  $region53: #{tpu_custom_call.1} parent=0
    _
  %s8 = ssub.s32 1, %s6
  %s9 = scalar_select 0, %s8, %s6
  loop: start=0, step=1, limit=6
  $region2: #{tpu_custom_call.1} parent=0 // loop_pre_header
    _
  $region3: #{tpu_custom_call.1} parent=0 // loop_header
    %s11 = sphi 0, %s15
    %p12 = scmp.ge.s32.totalorder %s11, 6
    %s18 = sphi 0, %s30
    %s19 = sphi 0, %s26
    %s20 = sphi 0, %s18
    %s21 = sphi 0, %s19
    %s22 = sphi 0, %s20
    %s23 = sphi 0, %s21
    %s35 = sphi 0, %s37
    %s38 = sphi 0, %s35
    %s39 = sphi 0, %s38
    %s55 = sphi 0, %s39
    %s63 = sphi 0, %s65
    %s66 = sphi 0, %s63
    %s67 = sphi 0, %s66
    %s83 = sphi 0, %s67
    %s87 = sphi 0, %s87
    %s89 = sphi 0, %s87
    %s90 = sphi 0, %s89
    %s104 = sphi 0, %s90
    %s114 = sphi 0, %s116
    %s117 = sphi 0, %s114
    %s118 = sphi 0, %s117
    %s134 = sphi 0, %s118
    %s144 = sphi 0, %s146
    %s147 = sphi 0, %s144
    %s148 = sphi 0, %s147
    %s164 = sphi 0, %s148
  $region4: #{tpu_custom_call.1} parent=0 // loop_header_branch
    %14 = sbr.rel (%p12) target = $region8
  $region5: #{tpu_custom_call.1} parent=0 // loop_body
    %s16 = ssub.s32 %s11, 1
    %s17 = ssub.s32 %s11, 2
    %s24 = sadd.s32 1, %s19
    %p25 = scmp.ge.s32.totalorder %s24, 2
    %s26 = scalar_select %p25, 0, %s24
    %s27 = sadd.s32 1, %s18
    %s28 = scalar_select %p25, %s27, %s18
    %p29 = scmp.ge.s32.totalorder %s28, 2
    %s30 = scalar_select %p29, 0, %s28
    %s31 = ssub.s32 %s18, %s30
    %s32 = ssub.s32 %s19, %s26
    %s33 = sor.u32 %s31, %s32
    %p34 = scmp.eq.s32.totalorder %s33, 0
    %s36 = sadd.s32 %s35, 1
    %s37 = scalar_select %p34, %s35, %s36
    %p40 = pneg %p34
    %p41 = scmp.eq.s32.totalorder %s11, 3
    %p42 = por %p40, %p41
    %p43 = scmp.ne.s32.totalorder %s35, %s38
    %p44 = scmp.eq.s32.totalorder %s11, 0
    %p45 = por %p43, %p44
    %p46 = scmp.ne.s32.totalorder %s35, %s38
    %p47 = scmp.eq.s32.totalorder %s16, 3
    %p48 = por %p46, %p47
    %p49 = scmp.ne.s32.totalorder %s38, %s39
    %p50 = scmp.eq.s32.totalorder %s16, 0
    %p51 = por %p49, %p50
    %p52 = scmp.ne.s32.totalorder %s38, %s39
    %p53 = scmp.eq.s32.totalorder %s17, 3
    %p54 = por %p52, %p53
    %p56 = scmp.ne.s32.totalorder %s39, %s55
    %p57 = scmp.eq.s32.totalorder %s17, 0
    %p58 = por %p56, %p57
    %s59 = ssub.s32 %s18, %s30
    %s60 = ssub.s32 %s19, %s26
    %s61 = sor.u32 %s59, %s60
    %p62 = scmp.eq.s32.totalorder %s61, 0
    %s64 = sadd.s32 %s63, 1
    %s65 = scalar_select %p62, %s63, %s64
    %p68 = pneg %p62
    %p69 = scmp.eq.s32.totalorder %s11, 3
    %p70 = por %p68, %p69
    %p71 = scmp.ne.s32.totalorder %s63, %s66
    %p72 = scmp.eq.s32.totalorder %s11, 0
    %p73 = por %p71, %p72
    %p74 = scmp.ne.s32.totalorder %s63, %s66
    %p75 = scmp.eq.s32.totalorder %s16, 3
    %p76 = por %p74, %p75
    %p77 = scmp.ne.s32.totalorder %s66, %s67
    %p78 = scmp.eq.s32.totalorder %s16, 0
    %p79 = por %p77, %p78
    %p80 = scmp.ne.s32.totalorder %s66, %s67
    %p81 = scmp.eq.s32.totalorder %s17, 3
    %p82 = por %p80, %p81
    %p84 = scmp.ne.s32.totalorder %s67, %s83
    %p85 = scmp.eq.s32.totalorder %s17, 0
    %p86 = por %p84, %p85
    %s88 = sadd.s32 %s87, 1
    %p91 = scmp.eq.s32.totalorder %s11, 3
    %p92 = scmp.ne.s32.totalorder %s87, %s89
    %p93 = scmp.eq.s32.totalorder %s11, 0
    %p94 = por %p92, %p93
    %p95 = scmp.ne.s32.totalorder %s87, %s89
    %p96 = scmp.eq.s32.totalorder %s16, 3
    %p97 = por %p95, %p96
    %p98 = scmp.ne.s32.totalorder %s89, %s90
    %p99 = scmp.eq.s32.totalorder %s16, 0
    %p100 = por %p98, %p99
    %p101 = scmp.ne.s32.totalorder %s89, %s90
    %p102 = scmp.eq.s32.totalorder %s17, 3
    %p103 = por %p101, %p102
    %p105 = scmp.ne.s32.totalorder %s90, %s104
    %p106 = scmp.eq.s32.totalorder %s17, 0
    %p107 = por %p105, %p106
    %s108 = smul.u32 %s18, 2
    %s109 = sadd.s32 %s108, %s19
    %s110 = smul.u32 %s30, 2
    %s111 = sadd.s32 %s110, %s26
    %s112 = ssub.s32 %s109, %s111
    %p113 = scmp.eq.s32.totalorder %s112, 0
    %s115 = sadd.s32 %s114, 1
    %s116 = scalar_select %p113, %s114, %s115
    %p119 = pneg %p113
    %p120 = scmp.eq.s32.totalorder %s11, 3
    %p121 = por %p119, %p120
    %p122 = scmp.ne.s32.totalorder %s114, %s117
    %p123 = scmp.eq.s32.totalorder %s11, 0
    %p124 = por %p122, %p123
    %p125 = scmp.ne.s32.totalorder %s114, %s117
    %p126 = scmp.eq.s32.totalorder %s16, 3
    %p127 = por %p125, %p126
    %p128 = scmp.ne.s32.totalorder %s117, %s118
    %p129 = scmp.eq.s32.totalorder %s16, 0
    %p130 = por %p128, %p129
    %p131 = scmp.ne.s32.totalorder %s117, %s118
    %p132 = scmp.eq.s32.totalorder %s17, 3
    %p133 = por %p131, %p132
    %p135 = scmp.ne.s32.totalorder %s118, %s134
    %p136 = scmp.eq.s32.totalorder %s17, 0
    %p137 = por %p135, %p136
    %s138 = smul.u32 %s18, 2
    %s139 = sadd.s32 %s138, %s19
    %s140 = smul.u32 %s30, 2
    %s141 = sadd.s32 %s140, %s26
    %s142 = ssub.s32 %s139, %s141
    %p143 = scmp.eq.s32.totalorder %s142, 0
    %s145 = sadd.s32 %s144, 1
    %s146 = scalar_select %p143, %s144, %s145
    %p149 = pneg %p143
    %p150 = scmp.eq.s32.totalorder %s11, 3
    %p151 = por %p149, %p150
    %p152 = scmp.ne.s32.totalorder %s144, %s147
    %p153 = scmp.eq.s32.totalorder %s11, 0
    %p154 = por %p152, %p153
    %p155 = scmp.ne.s32.totalorder %s144, %s147
    %p156 = scmp.eq.s32.totalorder %s16, 3
    %p157 = por %p155, %p156
    %p158 = scmp.ne.s32.totalorder %s147, %s148
    %p159 = scmp.eq.s32.totalorder %s16, 0
    %p160 = por %p158, %p159
    %p161 = scmp.ne.s32.totalorder %s147, %s148
    %p162 = scmp.eq.s32.totalorder %s17, 3
    %p163 = por %p161, %p162
    %p165 = scmp.ne.s32.totalorder %s148, %s164
    %p166 = scmp.eq.s32.totalorder %s17, 0
    %p167 = por %p165, %p166
    %p168 = scmp.le.s32.totalorder 1, %s11
    %p169 = scmp.lt.s32.totalorder %s11, 5
    %p170 = pnand %p168, %p169
    %p171 = pneg %p170
    // Predicated region
    $region9: #{tpu_custom_call.1} parent=5 // pred_check
      _
    $region10: #{tpu_custom_call.1} parent=5 // pred_check_branch
      %173 = sbr.rel (%p170) target = $region12
    $region11: #{tpu_custom_call.1} parent=5 // pred_region
      %s174 = ssub.s32 %s11, 1
      // Predicated region
      $region13: #{tpu_custom_call.1} parent=11 // pred_check
        %p175 = pneg %p100
      $region14: #{tpu_custom_call.1} parent=11 // pred_check_branch
        %177 = sbr.rel (%p175) target = $region16
      $region15: #{tpu_custom_call.1} parent=11 // pred_region
        _
      $region16: #{tpu_custom_call.1} parent=11 // pred_fallthru
        _
    $region12: #{tpu_custom_call.1} parent=5 // pred_fallthru
      _
    %p178 = scmp.lt.s32.totalorder %s11, 4
    // Predicated region
    $region17: #{tpu_custom_call.1} parent=5 // pred_check
      %p179 = pneg %p178
    $region18: #{tpu_custom_call.1} parent=5 // pred_check_branch
      %181 = sbr.rel (%p179) target = $region20
    $region19: #{tpu_custom_call.1} parent=5 // pred_region
      // Predicated region
      $region21: #{tpu_custom_call.1} parent=19 // pred_check
        %p182 = pneg %p45
      $region22: #{tpu_custom_call.1} parent=19 // pred_check_branch
        %184 = sbr.rel (%p182) target = $region24
      $region23: #{tpu_custom_call.1} parent=19 // pred_region
        %s185 = smul.u32 4, %s19
        %p186 = scmp.lt.s32.totalorder %s18, 1
        %s187 = scalar_select %p186, %s18, 1
        %p188 = scmp.lt.s32.totalorder %s185, 7
        %s189 = scalar_select %p188, %s185, 7
        %s190 = smul.addr %s187, 8
        %s191 = sadd.s32 %s189, %s190
        %s192 = smul.addr %s191, 8
        %s193 = scalar_lea.vmem %s0, %s192
        %s194 = smul.u32 4, %s19
      $region24: #{tpu_custom_call.1} parent=19 // pred_fallthru
        _
      // Predicated region
      $region25: #{tpu_custom_call.1} parent=19 // pred_check
        %p195 = pneg %p73
      $region26: #{tpu_custom_call.1} parent=19 // pred_check_branch
        %197 = sbr.rel (%p195) target = $region28
      $region27: #{tpu_custom_call.1} parent=19 // pred_region
        %p198 = scmp.lt.s32.totalorder %s18, 1
        %s199 = scalar_select %p198, %s18, 1
        %p200 = scmp.lt.s32.totalorder %s19, 1
        %s201 = scalar_select %p200, %s19, 1
        %s202 = smul.addr %s199, 2
        %s203 = sadd.s32 %s201, %s202
        %s204 = smul.addr %s203, 8
        %s205 = scalar_lea.vmem %s1, %s204
      $region28: #{tpu_custom_call.1} parent=19 // pred_fallthru
        _
    $region20: #{tpu_custom_call.1} parent=5 // pred_fallthru
      _
    %p206 = scmp.le.s32.totalorder 1, %s11
    %p207 = scmp.lt.s32.totalorder %s11, 5
    %p208 = pnand %p206, %p207
    %p209 = pneg %p208
    // Predicated region
    $region29: #{tpu_custom_call.1} parent=5 // pred_check
      _
    $region30: #{tpu_custom_call.1} parent=5 // pred_check_branch
      %211 = sbr.rel (%p208) target = $region32
    $region31: #{tpu_custom_call.1} parent=5 // pred_region
      %s212 = ssub.s32 %s11, 1
      %s213 = smul.u32 4, %s21
      %p214 = scmp.lt.s32.totalorder %s20, 1
      %s215 = scalar_select %p214, %s20, 1
      %p216 = scmp.lt.s32.totalorder %s213, 7
      %s217 = scalar_select %p216, %s213, 7
      %s218 = smul.addr %s215, 8
      %s219 = sadd.s32 %s217, %s218
      %s220 = smul.addr %s219, 8
      %s221 = scalar_lea.vmem %s0, %s220
      %p222 = pneg %p51
      %p223 = pneg %p48
      %p224 = scmp.lt.s32.totalorder %s20, 1
      %s225 = scalar_select %p224, %s20, 1
      %p226 = scmp.lt.s32.totalorder %s21, 1
      %s227 = scalar_select %p226, %s21, 1
      %s228 = smul.addr %s225, 2
      %s229 = sadd.s32 %s227, %s228
      %s230 = smul.addr %s229, 8
      %s231 = scalar_lea.vmem %s1, %s230
      %p232 = pneg %p79
      %p233 = pneg %p76
      %p234 = pneg %p100
      %p235 = pneg %p97
      %p236 = pneg %p130
      %p237 = pneg %p127
      %s238 = smul.u32 %s20, 2
      %s239 = sadd.s32 %s238, %s21
      %s240 = smul.u32 4, %s239
      %p241 = scmp.lt.s32.totalorder %s240, 15
      %s242 = scalar_select %p241, %s240, 15
      %s243 = smul.addr %s242, 8
      %s244 = scalar_lea.vmem %s3, %s243
      %p245 = pneg %p160
      %p246 = pneg %p157
      %s247 = smul.u32 %s20, 2
      %s248 = sadd.s32 %s247, %s21
      %p249 = scmp.lt.s32.totalorder %s248, 3
      %s250 = scalar_select %p249, %s248, 3
      %s251 = smul.addr %s250, 8
      %s252 = scalar_lea.vmem %s4, %s251
      %s253 = smul.u32 4, %s21
      %p254 = scmp.lt.s32.totalorder %s20, 1
      %s255 = scalar_select %p254, %s20, 1
      %p256 = scmp.lt.s32.totalorder %s253, 7
      %s257 = scalar_select %p256, %s253, 7
      %s258 = smul.addr %s255, 8
      %s259 = sadd.s32 %s257, %s258
      %s260 = smul.addr %s259, 8
      %s261 = scalar_lea.vmem %s0, %s260
      %s262 = smul.u32 4, %s21
      %p263 = scmp.lt.s32.totalorder %s20, 1
      %s264 = scalar_select %p263, %s20, 1
      %p265 = scmp.lt.s32.totalorder %s21, 1
      %s266 = scalar_select %p265, %s21, 1
      %s267 = smul.addr %s264, 2
      %s268 = sadd.s32 %s266, %s267
      %s269 = smul.addr %s268, 8
      %s270 = scalar_lea.vmem %s1, %s269
      %s271 = smul.u32 %s20, 2
      %s272 = sadd.s32 %s271, %s21
      %s273 = smul.u32 4, %s272
      %p274 = scmp.lt.s32.totalorder %s273, 15
      %s275 = scalar_select %p274, %s273, 15
      %s276 = smul.addr %s275, 8
      %s277 = scalar_lea.vmem %s3, %s276
      %s278 = smul.u32 %s20, 2
      %s279 = sadd.s32 %s278, %s21
      %s280 = smul.u32 4, %s279
      %s281 = smul.u32 %s20, 2
      %s282 = sadd.s32 %s281, %s21
      %p283 = scmp.lt.s32.totalorder %s282, 3
      %s284 = scalar_select %p283, %s282, 3
      %s285 = smul.addr %s284, 8
      %s286 = scalar_lea.vmem %s4, %s285
      %s287 = smul.u32 %s20, 2
      %s288 = sadd.s32 %s287, %s21
      %v289 = vld [vmem:[%s261] sm:$0xff]
      %v290 = vld [vmem:[%s261 + $0x8] sm:$0xff]
      %v291 = vld [vmem:[%s261 + $0x10] sm:$0xff]
      %v292 = vld [vmem:[%s261 + $0x18] sm:$0xff]
      %v293 = vld [vmem:[%s2] sm:$0xff]
      %v294 = vld [vmem:[%s2 + $0x8] sm:$0xff]
      %v295 = vld [vmem:[%s2 + $0x10] sm:$0xff]
      %vm296 = vcmask 195584
      %v298 = vsel %vm296, %v289, 0
      %v301 = vsel %vm296, %v290, 0
      %v304 = vsel %vm296, %v291, 0
      %v307 = vsel %vm296, %v292, 0
      %309 = vmatprep.subr.mxu0 0.0
      %310 = vmatpush1.msra.mxu0 %v293
      %311 = vmatprep.subr.mxu0 0.0
      %312 = vmatpush1.msra.mxu0 %v294
      %313 = vmatprep.subr.mxu0 0.0
      %314 = vmatpush1.msra.mxu0 %v295
      %315 = vmatprep.subr.mxu0 0.0
      %316 = vmatpush1.msra.mxu0 0.0
      %317 = vmatprep.subr.mxu0 0.0
      %318 = vmatpush1.msra.mxu0 0.0
      %319 = vmatprep.subr.mxu0 0.0
      %320 = vmatpush1.msra.mxu0 0.0
      %321 = vmatprep.subr.mxu0 0.0
      %322 = vmatpush1.msra.mxu0 0.0
      %323 = vmatprep.subr.mxu0 0.0
      %324 = vmatpush1.msra.mxu0 0.0
      %325 = vmatprep.subr.mxu0 0.0
      %326 = vmatpush1.msra.mxu0 0.0
      %327 = vmatprep.subr.mxu0 0.0
      %328 = vmatpush1.msra.mxu0 0.0
      %329 = vmatprep.subr.mxu0 0.0
      %330 = vmatpush1.msra.mxu0 0.0
      %331 = vmatprep.subr.mxu0 0.0
      %332 = vmatpush1.msra.mxu0 0.0
      %333 = vmatprep.subr.mxu0 0.0
      %334 = vmatpush1.msra.mxu0 0.0
      %335 = vmatprep.subr.mxu0 0.0
      %336 = vmatpush1.msra.mxu0 0.0
      %337 = vmatprep.subr.mxu0 0.0
      %338 = vmatpush1.msra.mxu0 0.0
      %339 = vmatprep.subr.mxu0 0.0
      %340 = vmatpush1.msra.mxu0 0.0
      %341 = vmatprep.subr.mxu0 0.0
      %342 = vmatpush1.msra.mxu0 0.0
      %343 = vmatprep.subr.mxu0 0.0
      %344 = vmatpush1.msra.mxu0 0.0
      %345 = vmatprep.subr.mxu0 0.0
      %346 = vmatpush1.msra.mxu0 0.0
      %347 = vmatprep.subr.mxu0 0.0
      %348 = vmatpush1.msra.mxu0 0.0
      %349 = vmatprep.subr.mxu0 0.0
      %350 = vmatpush1.msra.mxu0 0.0
      %351 = vmatprep.subr.mxu0 0.0
      %352 = vmatpush1.msra.mxu0 0.0
      %353 = vmatprep.subr.mxu0 0.0
      %354 = vmatpush1.msra.mxu0 0.0
      %355 = vmatprep.subr.mxu0 0.0
      %356 = vmatpush1.msra.mxu0 0.0
      %357 = vmatprep.subr.mxu0 0.0
      %358 = vmatpush1.msra.mxu0 0.0
      %359 = vmatprep.subr.mxu0 0.0
      %360 = vmatpush1.msra.mxu0 0.0
      %361 = vmatprep.subr.mxu0 0.0
      %362 = vmatpush1.msra.mxu0 0.0
      %363 = vmatprep.subr.mxu0 0.0
      %364 = vmatpush1.msra.mxu0 0.0
      %365 = vmatprep.subr.mxu0 0.0
      %366 = vmatpush1.msra.mxu0 0.0
      %367 = vmatprep.subr.mxu0 0.0
      %368 = vmatpush1.msra.mxu0 0.0
      %369 = vmatprep.subr.mxu0 0.0
      %370 = vmatpush1.msra.mxu0 0.0
      %371 = vmatprep.subr.mxu0 0.0
      %372 = vmatpush1.msra.mxu0 0.0
      %373 = vmatprep.mubr.f32.mxu0 0.0
      %374 = vmatmul.mubr.f32.gmra.mrb[0].mxu0 %v298
      %v375 = vpop.f32.mrb[0].mxu0
      %v376 = vadd.f32 0.0, %v375
      %v377 = vpop.f32.mrb[0].mxu0
      %378 = vmatprep.mubr.f32.mxu0 0.0
      %379 = vmatmul.mubr.f32.gmra.mrb[0].mxu0 %v301
      %v380 = vpop.f32.mrb[0].mxu0
      %v381 = vadd.f32 0.0, %v380
      %v382 = vpop.f32.mrb[0].mxu0
      %383 = vmatprep.mubr.f32.mxu0 0.0
      %384 = vmatmul.mubr.f32.gmra.mrb[0].mxu0 %v304
      %v385 = vpop.f32.mrb[0].mxu0
      %v386 = vadd.f32 0.0, %v385
      %v387 = vpop.f32.mrb[0].mxu0
      %388 = vmatprep.mubr.f32.mxu0 0.0
      %389 = vmatmul.mubr.f32.gmra.mrb[0].mxu0 %v307
      %v390 = vpop.f32.mrb[0].mxu0
      %v391 = vadd.f32 0.0, %v390
      %v392 = vpop.f32.mrb[0].mxu0
      %393 = vdwg.mxu0
      %vm394 = vcmask 64512
      %395 = vst.msk [vmem:[#allocation2] sm:$0xff] %vm394, %v376
      %396 = vst.msk [vmem:[#allocation2 + $0x8] sm:$0xff] %vm394, %v381
      %397 = vst.msk [vmem:[#allocation2 + $0x10] sm:$0xff] %vm394, %v386
      %398 = vst.msk [vmem:[#allocation2 + $0x18] sm:$0xff] %vm394, %v391
      %v399 = vld [vmem:[#allocation2] sm:$0xff]
      %v400 = vld [vmem:[#allocation2 + $0x8] sm:$0xff]
      %v401 = vld [vmem:[#allocation2 + $0x10] sm:$0xff]
      %v402 = vld [vmem:[%s261 + $0x8] sm:$0xff]
      %v403 = vld [vmem:[%s261 + $0x10] sm:$0xff]
      %v404 = vld [vmem:[%s261 + $0x18] sm:$0xff]
      %s405 = scalar_lea.vmem %s2, 24
      %v406 = vld [vmem:[%s405] sm:$0xff]
      %v407 = vld [vmem:[%s405 + $0x8] sm:$0xff]
      %v408 = vld [vmem:[%s405 + $0x10] sm:$0xff]
      %v410 = vsel %vm296, %v402, 0
      %v413 = vsel %vm296, %v403, 0
      %v416 = vsel %vm296, %v404, 0
      %418 = vmatprep.subr.mxu0 0.0
      %419 = vmatpush1.msra.mxu0 %v406
      %420 = vmatprep.subr.mxu0 0.0
      %421 = vmatpush1.msra.mxu0 %v407
      %422 = vmatprep.subr.mxu0 0.0
      %423 = vmatpush1.msra.mxu0 %v408
      %424 = vmatprep.subr.mxu0 0.0
      %425 = vmatpush1.msra.mxu0 0.0
      %426 = vmatprep.subr.mxu0 0.0
      %427 = vmatpush1.msra.mxu0 0.0
      %428 = vmatprep.subr.mxu0 0.0
      %429 = vmatpush1.msra.mxu0 0.0
      %430 = vmatprep.subr.mxu0 0.0
      %431 = vmatpush1.msra.mxu0 0.0
      %432 = vmatprep.subr.mxu0 0.0
      %433 = vmatpush1.msra.mxu0 0.0
      %434 = vmatprep.subr.mxu0 0.0
      %435 = vmatpush1.msra.mxu0 0.0
      %436 = vmatprep.subr.mxu0 0.0
      %437 = vmatpush1.msra.mxu0 0.0
      %438 = vmatprep.subr.mxu0 0.0
      %439 = vmatpush1.msra.mxu0 0.0
      %440 = vmatprep.subr.mxu0 0.0
      %441 = vmatpush1.msra.mxu0 0.0
      %442 = vmatprep.subr.mxu0 0.0
      %443 = vmatpush1.msra.mxu0 0.0
      %444 = vmatprep.subr.mxu0 0.0
      %445 = vmatpush1.msra.mxu0 0.0
      %446 = vmatprep.subr.mxu0 0.0
      %447 = vmatpush1.msra.mxu0 0.0
      %448 = vmatprep.subr.mxu0 0.0
      %449 = vmatpush1.msra.mxu0 0.0
      %450 = vmatprep.subr.mxu0 0.0
      %451 = vmatpush1.msra.mxu0 0.0
      %452 = vmatprep.subr.mxu0 0.0
      %453 = vmatpush1.msra.mxu0 0.0
      %454 = vmatprep.subr.mxu0 0.0
      %455 = vmatpush1.msra.mxu0 0.0
      %456 = vmatprep.subr.mxu0 0.0
      %457 = vmatpush1.msra.mxu0 0.0
      %458 = vmatprep.subr.mxu0 0.0
      %459 = vmatpush1.msra.mxu0 0.0
      %460 = vmatprep.subr.mxu0 0.0
      %461 = vmatpush1.msra.mxu0 0.0
      %462 = vmatprep.subr.mxu0 0.0
      %463 = vmatpush1.msra.mxu0 0.0
      %464 = vmatprep.subr.mxu0 0.0
      %465 = vmatpush1.msra.mxu0 0.0
      %466 = vmatprep.subr.mxu0 0.0
      %467 = vmatpush1.msra.mxu0 0.0
      %468 = vmatprep.subr.mxu0 0.0
      %469 = vmatpush1.msra.mxu0 0.0
      %470 = vmatprep.subr.mxu0 0.0
      %471 = vmatpush1.msra.mxu0 0.0
      %472 = vmatprep.subr.mxu0 0.0
      %473 = vmatpush1.msra.mxu0 0.0
      %474 = vmatprep.subr.mxu0 0.0
      %475 = vmatpush1.msra.mxu0 0.0
      %476 = vmatprep.subr.mxu0 0.0
      %477 = vmatpush1.msra.mxu0 0.0
      %478 = vmatprep.subr.mxu0 0.0
      %479 = vmatpush1.msra.mxu0 0.0
      %480 = vmatprep.subr.mxu0 0.0
      %481 = vmatpush1.msra.mxu0 0.0
      %482 = vmatprep.mubr.f32.mxu0 0.0
      %483 = vmatmul.mubr.f32.gmra.mrb[0].mxu0 %v410
      %v484 = vpop.f32.mrb[0].mxu0
      %v485 = vadd.f32 0.0, %v484
      %v486 = vpop.f32.mrb[0].mxu0
      %487 = vmatprep.mubr.f32.mxu0 0.0
      %488 = vmatmul.mubr.f32.gmra.mrb[0].mxu0 %v413
      %v489 = vpop.f32.mrb[0].mxu0
      %v490 = vadd.f32 0.0, %v489
      %v491 = vpop.f32.mrb[0].mxu0
      %492 = vmatprep.mubr.f32.mxu0 0.0
      %493 = vmatmul.mubr.f32.gmra.mrb[0].mxu0 %v416
      %v494 = vpop.f32.mrb[0].mxu0
      %v495 = vadd.f32 0.0, %v494
      %v496 = vpop.f32.mrb[0].mxu0
      %497 = vdwg.mxu0
      %v498 = vadd.f32 %v399, %v485
      %v499 = vadd.f32 %v400, %v490
      %v500 = vadd.f32 %v401, %v495
      %501 = vst.msk [vmem:[#allocation2] sm:$0xff] %vm394, %v498
      %502 = vst.msk [vmem:[#allocation2 + $0x8] sm:$0xff] %vm394, %v499
      %503 = vst.msk [vmem:[#allocation2 + $0x10] sm:$0xff] %vm394, %v500
      %v504 = vld [vmem:[#allocation2 + $0x18] sm:$0xff]
      %v505 = vld [vmem:[%s270] sm:$0xff]
      %v506 = vld [vmem:[%s405] sm:$0xff]
      %v507 = vld [vmem:[%s405 + $0x8] sm:$0xff]
      %v508 = vld [vmem:[%s405 + $0x10] sm:$0xff]
      %v510 = vsel %vm296, %v505, 0
      %512 = vmatprep.subr.mxu0 0.0
      %513 = vmatpush1.msra.mxu0 %v506
      %514 = vmatprep.subr.mxu0 0.0
      %515 = vmatpush1.msra.mxu0 %v507
      %516 = vmatprep.subr.mxu0 0.0
      %517 = vmatpush1.msra.mxu0 %v508
      %518 = vmatprep.subr.mxu0 0.0
      %519 = vmatpush1.msra.mxu0 0.0
      %520 = vmatprep.subr.mxu0 0.0
      %521 = vmatpush1.msra.mxu0 0.0
      %522 = vmatprep.subr.mxu0 0.0
      %523 = vmatpush1.msra.mxu0 0.0
      %524 = vmatprep.subr.mxu0 0.0
      %525 = vmatpush1.msra.mxu0 0.0
      %526 = vmatprep.subr.mxu0 0.0
      %527 = vmatpush1.msra.mxu0 0.0
      %528 = vmatprep.subr.mxu0 0.0
      %529 = vmatpush1.msra.mxu0 0.0
      %530 = vmatprep.subr.mxu0 0.0
      %531 = vmatpush1.msra.mxu0 0.0
      %532 = vmatprep.subr.mxu0 0.0
      %533 = vmatpush1.msra.mxu0 0.0
      %534 = vmatprep.subr.mxu0 0.0
      %535 = vmatpush1.msra.mxu0 0.0
      %536 = vmatprep.subr.mxu0 0.0
      %537 = vmatpush1.msra.mxu0 0.0
      %538 = vmatprep.subr.mxu0 0.0
      %539 = vmatpush1.msra.mxu0 0.0
      %540 = vmatprep.subr.mxu0 0.0
      %541 = vmatpush1.msra.mxu0 0.0
      %542 = vmatprep.subr.mxu0 0.0
      %543 = vmatpush1.msra.mxu0 0.0
      %544 = vmatprep.subr.mxu0 0.0
      %545 = vmatpush1.msra.mxu0 0.0
      %546 = vmatprep.subr.mxu0 0.0
      %547 = vmatpush1.msra.mxu0 0.0
      %548 = vmatprep.subr.mxu0 0.0
      %549 = vmatpush1.msra.mxu0 0.0
      %550 = vmatprep.subr.mxu0 0.0
      %551 = vmatpush1.msra.mxu0 0.0
      %552 = vmatprep.subr.mxu0 0.0
      %553 = vmatpush1.msra.mxu0 0.0
      %554 = vmatprep.subr.mxu0 0.0
      %555 = vmatpush1.msra.mxu0 0.0
      %556 = vmatprep.subr.mxu0 0.0
      %557 = vmatpush1.msra.mxu0 0.0
      %558 = vmatprep.subr.mxu0 0.0
      %559 = vmatpush1.msra.mxu0 0.0
      %560 = vmatprep.subr.mxu0 0.0
      %561 = vmatpush1.msra.mxu0 0.0
      %562 = vmatprep.subr.mxu0 0.0
      %563 = vmatpush1.msra.mxu0 0.0
      %564 = vmatprep.subr.mxu0 0.0
      %565 = vmatpush1.msra.mxu0 0.0
      %566 = vmatprep.subr.mxu0 0.0
      %567 = vmatpush1.msra.mxu0 0.0
      %568 = vmatprep.subr.mxu0 0.0
      %569 = vmatpush1.msra.mxu0 0.0
      %570 = vmatprep.subr.mxu0 0.0
      %571 = vmatpush1.msra.mxu0 0.0
      %572 = vmatprep.subr.mxu0 0.0
      %573 = vmatpush1.msra.mxu0 0.0
      %574 = vmatprep.subr.mxu0 0.0
      %575 = vmatpush1.msra.mxu0 0.0
      %576 = vmatprep.mubr.f32.mxu0 0.0
      %577 = vmatmul.mubr.f32.gmra.mrb[0].mxu0 %v510
      %v578 = vpop.f32.mrb[0].mxu0
      %v579 = vadd.f32 0.0, %v578
      %v580 = vpop.f32.mrb[0].mxu0
      %581 = vdwg.mxu0
      %v582 = vadd.f32 %v504, %v579
      %583 = vst.msk [vmem:[#allocation2 + $0x18] sm:$0xff] %vm394, %v582
      %v584 = vld [vmem:[#allocation2] sm:$0xff]
      %v585 = vld [vmem:[#allocation2 + $0x8] sm:$0xff]
      %v586 = vld [vmem:[#allocation2 + $0x10] sm:$0xff]
      %v587 = vld [vmem:[#allocation2 + $0x18] sm:$0xff]
      %588 = vst.msk [vmem:[%s277] sm:$0xff] %vm394, %v584
      %589 = vst.msk [vmem:[%s277 + $0x8] sm:$0xff] %vm394, %v585
      %590 = vst.msk [vmem:[%s277 + $0x10] sm:$0xff] %vm394, %v586
      %591 = vst.msk [vmem:[%s277 + $0x18] sm:$0xff] %vm394, %v587
      %v592 = vsel %vm394, %v584, 0.0
      %v593 = vsel %vm394, %v585, 0.0
      %v594 = vadd.f32 %v592, %v593
      %v595 = vsel %vm394, %v586, 0.0
      %v596 = vadd.f32 %v594, %v595
      %v597 = vsel %vm394, %v587, 0.0
      %v598 = vadd.f32 %v596, %v597
      %v599 = vrot.slane %v598, 4
      %v600 = vadd.f32 %v598, %v599
      %v601 = vrot.slane %v600, 2
      %v602 = vadd.f32 %v600, %v601
      %v603 = vrot.slane %v602, 1
      %v604 = vadd.f32 %v602, %v603
      %v605 = vmul.f32 %v584, %v584
      %v606 = vmul.f32 %v585, %v585
      %v607 = vmul.f32 %v586, %v586
      %v608 = vmul.f32 %v587, %v587
      %v609 = vsel %vm394, %v605, 0.0
      %v610 = vsel %vm394, %v606, 0.0
      %v611 = vadd.f32 %v609, %v610
      %v612 = vsel %vm394, %v607, 0.0
      %v613 = vadd.f32 %v611, %v612
      %v614 = vsel %vm394, %v608, 0.0
      %v615 = vadd.f32 %v613, %v614
      %v616 = vrot.slane %v615, 4
      %v617 = vadd.f32 %v615, %v616
      %v618 = vrot.slane %v617, 2
      %v619 = vadd.f32 %v617, %v618
      %v620 = vrot.slane %v619, 1
      %v621 = vadd.f32 %v619, %v620
      %v622 = vlaneseq
      %v623 = vshrl.u32 %v622, 7
      %vm624 = vcmp.eq.s32.totalorder %v623, 0
      %vm625 = vcmp.eq.s32.totalorder %v623, 1
      %v626 = vsel %vm625, %v621, 0.0
      %v627 = vsel %vm624, %v604, %v626
      %628 = vst.msk [vmem:[%s286] sm:$0xff] %vm394, %v627
      %s629 = smul.u32 %s20, 2
      %s630 = sadd.s32 %s629, %s21
      %s631 = smul.u32 4, %s630
      %p632 = scmp.lt.s32.totalorder %s631, 15
      %s633 = scalar_select %p632, %s631, 15
      %s634 = smul.addr %s633, 8
      %s635 = scalar_lea.vmem %s3, %s634
      %s636 = smul.u32 %s20, 2
      %s637 = sadd.s32 %s636, %s21
      %p638 = scmp.lt.s32.totalorder %s637, 3
      %s639 = scalar_select %p638, %s637, 3
      %s640 = smul.addr %s639, 8
      %s641 = scalar_lea.vmem %s4, %s640
      // Predicated region
      $region33: #{tpu_custom_call.1} parent=31 // pred_check
        %p642 = pneg %p127
      $region34: #{tpu_custom_call.1} parent=31 // pred_check_branch
        %644 = sbr.rel (%p642) target = $region36
      $region35: #{tpu_custom_call.1} parent=31 // pred_region
        %s645 = smul.u32 %s20, 2
        %s646 = sadd.s32 %s645, %s21
        %s647 = smul.u32 4, %s646
      $region36: #{tpu_custom_call.1} parent=31 // pred_fallthru
        _
      // Predicated region
      $region37: #{tpu_custom_call.1} parent=31 // pred_check
        %p648 = pneg %p157
      $region38: #{tpu_custom_call.1} parent=31 // pred_check_branch
        %650 = sbr.rel (%p648) target = $region40
      $region39: #{tpu_custom_call.1} parent=31 // pred_region
        %s651 = smul.u32 %s20, 2
        %s652 = sadd.s32 %s651, %s21
      $region40: #{tpu_custom_call.1} parent=31 // pred_fallthru
        _
    $region32: #{tpu_custom_call.1} parent=5 // pred_fallthru
      _
    %p653 = scmp.le.s32.totalorder 2, %s11
    // Predicated region
    $region41: #{tpu_custom_call.1} parent=5 // pred_check
      %p654 = pneg %p653
    $region42: #{tpu_custom_call.1} parent=5 // pred_check_branch
      %656 = sbr.rel (%p654) target = $region44
    $region43: #{tpu_custom_call.1} parent=5 // pred_region
      %s657 = ssub.s32 %s11, 2
      // Predicated region
      $region45: #{tpu_custom_call.1} parent=43 // pred_check
        %p658 = pneg %p133
      $region46: #{tpu_custom_call.1} parent=43 // pred_check_branch
        %660 = sbr.rel (%p658) target = $region48
      $region47: #{tpu_custom_call.1} parent=43 // pred_region
        %s661 = smul.u32 %s22, 2
        %s662 = sadd.s32 %s661, %s23
        %s663 = smul.u32 4, %s662
        %p664 = scmp.lt.s32.totalorder %s663, 15
        %s665 = scalar_select %p664, %s663, 15
        %s666 = smul.addr %s665, 8
        %s667 = scalar_lea.vmem %s3, %s666
      $region48: #{tpu_custom_call.1} parent=43 // pred_fallthru
        _
      // Predicated region
      $region49: #{tpu_custom_call.1} parent=43 // pred_check
        %p668 = pneg %p163
      $region50: #{tpu_custom_call.1} parent=43 // pred_check_branch
        %670 = sbr.rel (%p668) target = $region52
      $region51: #{tpu_custom_call.1} parent=43 // pred_region
        %s671 = smul.u32 %s22, 2
        %s672 = sadd.s32 %s671, %s23
        %p673 = scmp.lt.s32.totalorder %s672, 3
        %s674 = scalar_select %p673, %s672, 3
        %s675 = smul.addr %s674, 8
        %s676 = scalar_lea.vmem %s4, %s675
      $region52: #{tpu_custom_call.1} parent=43 // pred_fallthru
        _
    $region44: #{tpu_custom_call.1} parent=5 // pred_fallthru
      _
  $region6: #{tpu_custom_call.1} parent=0 // loop_footer
    %s15 = sadd.s32 1, %s11
  $region7: #{tpu_custom_call.1} parent=0 // loop_footer_branch
    %10 = sbr.rel target = $region3
  $region8: #{tpu_custom_call.1} parent=0 // loop_exit
    _

// kernel: tpu_custom_call.1
$region0: #{tpu_custom_call.1}
  #allocation0 [shape = 'u32[]', space=smem, size = 0x4, offset = 0x4, fixed_abs, tag = 'smem constant byte address 0x4 - core index']
  #allocation1 [shape = 'u32[144,128]{1,0:T(1,128)}', space=vmem, size = 0x12000, scoped, tag = 'internal scratch']
  #allocation2 [shape = 'f32[32,8]{1,0:T(8,128)}', space=vmem, size = 0x4000, scoped, tag = 'scratch operand']
  %s0 = inlined_call_operand.vmem [shape: f32[2,64,24], index: 0, kind: input, shape index: {}]
  %s1 = inlined_call_operand.vmem [shape: f32[2,2,8,24], index: 1, kind: input, shape index: {}]
  %s2 = inlined_call_operand.vmem [shape: f32[2,24,8], index: 2, kind: input, shape index: {}]
  %s3 = inlined_call_operand.vmem [shape: f32[128,8], index: 3, kind: output, shape index: {0}]
  %s4 = inlined_call_operand.vmem [shape: f32[32,8], index: 4, kind: output, shape index: {1}]
  %5 = xla_tuple %s3, %s4
  %s6 = sld [smem:[#allocation0]]
  $region53: #{tpu_custom_call.1} parent=0
    _
  %s8 = ssub.s32 1, %s6
  %s9 = scalar_select 0, %s8, %s6
  loop: start=0, step=1, limit=6
  $region2: #{tpu_custom_call.1} parent=0 // loop_pre_header
    _
  $region3: #{tpu_custom_call.1} parent=0 // loop_header
    %s11 = sphi 0, %s15
    %p12 = scmp.ge.s32.totalorder %s11, 6
    %s18 = sphi 0, %s30
    %s19 = sphi 0, %s26
    %s20 = sphi 0, %s18
    %s21 = sphi 0, %s19
    %s22 = sphi 0, %s20
    %s23 = sphi 0, %s21
    %s35 = sphi 0, %s37
    %s38 = sphi 0, %s35
    %s39 = sphi 0, %s38
    %s55 = sphi 0, %s39
    %s63 = sphi 0, %s65
    %s66 = sphi 0, %s63
    %s67 = sphi 0, %s66
    %s83 = sphi 0, %s67
    %s87 = sphi 0, %s87
    %s89 = sphi 0, %s87
    %s90 = sphi 0, %s89
    %s104 = sphi 0, %s90
    %s114 = sphi 0, %s116
    %s117 = sphi 0, %s114
    %s118 = sphi 0, %s117
    %s134 = sphi 0, %s118
    %s144 = sphi 0, %s146
    %s147 = sphi 0, %s144
    %s148 = sphi 0, %s147
    %s164 = sphi 0, %s148
  $region4: #{tpu_custom_call.1} parent=0 // loop_header_branch
    %14 = sbr.rel (%p12) target = $region8
  $region5: #{tpu_custom_call.1} parent=0 // loop_body
    %s16 = ssub.s32 %s11, 1
    %s17 = ssub.s32 %s11, 2
    %s24 = sadd.s32 1, %s19
    %p25 = scmp.ge.s32.totalorder %s24, 2
    %s26 = scalar_select %p25, 0, %s24
    %s27 = sadd.s32 1, %s18
    %s28 = scalar_select %p25, %s27, %s18
    %p29 = scmp.ge.s32.totalorder %s28, 2
    %s30 = scalar_select %p29, 0, %s28
    %s31 = ssub.s32 %s18, %s30
    %s32 = ssub.s32 %s19, %s26
    %s33 = sor.u32 %s31, %s32
    %p34 = scmp.eq.s32.totalorder %s33, 0
    %s36 = sadd.s32 %s35, 1
    %s37 = scalar_select %p34, %s35, %s36
    %p40 = pneg %p34
    %p41 = scmp.eq.s32.totalorder %s11, 3
    %p42 = por %p40, %p41
    %p43 = scmp.ne.s32.totalorder %s35, %s38
    %p44 = scmp.eq.s32.totalorder %s11, 0
    %p45 = por %p43, %p44
    %p46 = scmp.ne.s32.totalorder %s35, %s38
    %p47 = scmp.eq.s32.totalorder %s16, 3
    %p48 = por %p46, %p47
    %p49 = scmp.ne.s32.totalorder %s38, %s39
    %p50 = scmp.eq.s32.totalorder %s16, 0
    %p51 = por %p49, %p50
    %p52 = scmp.ne.s32.totalorder %s38, %s39
    %p53 = scmp.eq.s32.totalorder %s17, 3
    %p54 = por %p52, %p53
    %p56 = scmp.ne.s32.totalorder %s39, %s55
    %p57 = scmp.eq.s32.totalorder %s17, 0
    %p58 = por %p56, %p57
    %s59 = ssub.s32 %s18, %s30
    %s60 = ssub.s32 %s19, %s26
    %s61 = sor.u32 %s59, %s60
    %p62 = scmp.eq.s32.totalorder %s61, 0
    %s64 = sadd.s32 %s63, 1
    %s65 = scalar_select %p62, %s63, %s64
    %p68 = pneg %p62
    %p69 = scmp.eq.s32.totalorder %s11, 3
    %p70 = por %p68, %p69
    %p71 = scmp.ne.s32.totalorder %s63, %s66
    %p72 = scmp.eq.s32.totalorder %s11, 0
    %p73 = por %p71, %p72
    %p74 = scmp.ne.s32.totalorder %s63, %s66
    %p75 = scmp.eq.s32.totalorder %s16, 3
    %p76 = por %p74, %p75
    %p77 = scmp.ne.s32.totalorder %s66, %s67
    %p78 = scmp.eq.s32.totalorder %s16, 0
    %p79 = por %p77, %p78
    %p80 = scmp.ne.s32.totalorder %s66, %s67
    %p81 = scmp.eq.s32.totalorder %s17, 3
    %p82 = por %p80, %p81
    %p84 = scmp.ne.s32.totalorder %s67, %s83
    %p85 = scmp.eq.s32.totalorder %s17, 0
    %p86 = por %p84, %p85
    %s88 = sadd.s32 %s87, 1
    %p91 = scmp.eq.s32.totalorder %s11, 3
    %p92 = scmp.ne.s32.totalorder %s87, %s89
    %p93 = scmp.eq.s32.totalorder %s11, 0
    %p94 = por %p92, %p93
    %p95 = scmp.ne.s32.totalorder %s87, %s89
    %p96 = scmp.eq.s32.totalorder %s16, 3
    %p97 = por %p95, %p96
    %p98 = scmp.ne.s32.totalorder %s89, %s90
    %p99 = scmp.eq.s32.totalorder %s16, 0
    %p100 = por %p98, %p99
    %p101 = scmp.ne.s32.totalorder %s89, %s90
    %p102 = scmp.eq.s32.totalorder %s17, 3
    %p103 = por %p101, %p102
    %p105 = scmp.ne.s32.totalorder %s90, %s104
    %p106 = scmp.eq.s32.totalorder %s17, 0
    %p107 = por %p105, %p106
    %s108 = smul.u32 %s18, 2
    %s109 = sadd.s32 %s108, %s19
    %s110 = smul.u32 %s30, 2
    %s111 = sadd.s32 %s110, %s26
    %s112 = ssub.s32 %s109, %s111
    %p113 = scmp.eq.s32.totalorder %s112, 0
    %s115 = sadd.s32 %s114, 1
    %s116 = scalar_select %p113, %s114, %s115
    %p119 = pneg %p113
    %p120 = scmp.eq.s32.totalorder %s11, 3
    %p121 = por %p119, %p120
    %p122 = scmp.ne.s32.totalorder %s114, %s117
    %p123 = scmp.eq.s32.totalorder %s11, 0
    %p124 = por %p122, %p123
    %p125 = scmp.ne.s32.totalorder %s114, %s117
    %p126 = scmp.eq.s32.totalorder %s16, 3
    %p127 = por %p125, %p126
    %p128 = scmp.ne.s32.totalorder %s117, %s118
    %p129 = scmp.eq.s32.totalorder %s16, 0
    %p130 = por %p128, %p129
    %p131 = scmp.ne.s32.totalorder %s117, %s118
    %p132 = scmp.eq.s32.totalorder %s17, 3
    %p133 = por %p131, %p132
    %p135 = scmp.ne.s32.totalorder %s118, %s134
    %p136 = scmp.eq.s32.totalorder %s17, 0
    %p137 = por %p135, %p136
    %s138 = smul.u32 %s18, 2
    %s139 = sadd.s32 %s138, %s19
    %s140 = smul.u32 %s30, 2
    %s141 = sadd.s32 %s140, %s26
    %s142 = ssub.s32 %s139, %s141
    %p143 = scmp.eq.s32.totalorder %s142, 0
    %s145 = sadd.s32 %s144, 1
    %s146 = scalar_select %p143, %s144, %s145
    %p149 = pneg %p143
    %p150 = scmp.eq.s32.totalorder %s11, 3
    %p151 = por %p149, %p150
    %p152 = scmp.ne.s32.totalorder %s144, %s147
    %p153 = scmp.eq.s32.totalorder %s11, 0
    %p154 = por %p152, %p153
    %p155 = scmp.ne.s32.totalorder %s144, %s147
    %p156 = scmp.eq.s32.totalorder %s16, 3
    %p157 = por %p155, %p156
    %p158 = scmp.ne.s32.totalorder %s147, %s148
    %p159 = scmp.eq.s32.totalorder %s16, 0
    %p160 = por %p158, %p159
    %p161 = scmp.ne.s32.totalorder %s147, %s148
    %p162 = scmp.eq.s32.totalorder %s17, 3
    %p163 = por %p161, %p162
    %p165 = scmp.ne.s32.totalorder %s148, %s164
    %p166 = scmp.eq.s32.totalorder %s17, 0
    %p167 = por %p165, %p166
    %p168 = scmp.le.s32.totalorder 1, %s11
    %p169 = scmp.lt.s32.totalorder %s11, 5
    %p170 = pnand %p168, %p169
    %p171 = pneg %p170
    // Predicated region
    $region9: #{tpu_custom_call.1} parent=5 // pred_check
      _
    $region10: #{tpu_custom_call.1} parent=5 // pred_check_branch
      %173 = sbr.rel (%p170) target = $region12
    $region11: #{tpu_custom_call.1} parent=5 // pred_region
      %s174 = ssub.s32 %s11, 1
      // Predicated region
      $region13: #{tpu_custom_call.1} parent=11 // pred_check
        %p175 = pneg %p100
      $region14: #{tpu_custom_call.1} parent=11 // pred_check_branch
        %177 = sbr.rel (%p175) target = $region16
      $region15: #{tpu_custom_call.1} parent=11 // pred_region
        _
      $region16: #{tpu_custom_call.1} parent=11 // pred_fallthru
        _
    $region12: #{tpu_custom_call.1} parent=5 // pred_fallthru
      _
    %p178 = scmp.lt.s32.totalorder %s11, 4
    // Predicated region
    $region17: #{tpu_custom_call.1} parent=5 // pred_check
      %p179 = pneg %p178
    $region18: #{tpu_custom_call.1} parent=5 // pred_check_branch
      %181 = sbr.rel (%p179) target = $region20
    $region19: #{tpu_custom_call.1} parent=5 // pred_region
      // Predicated region
      $region21: #{tpu_custom_call.1} parent=19 // pred_check
        %p182 = pneg %p45
      $region22: #{tpu_custom_call.1} parent=19 // pred_check_branch
        %184 = sbr.rel (%p182) target = $region24
      $region23: #{tpu_custom_call.1} parent=19 // pred_region
        %s185 = smul.u32 4, %s19
        %p186 = scmp.lt.s32.totalorder %s18, 1
        %s187 = scalar_select %p186, %s18, 1
        %p188 = scmp.lt.s32.totalorder %s185, 7
        %s189 = scalar_select %p188, %s185, 7
        %s190 = smul.addr %s187, 8
        %s191 = sadd.s32 %s189, %s190
        %s192 = smul.addr %s191, 8
        %s193 = scalar_lea.vmem %s0, %s192
        %s194 = smul.u32 4, %s19
      $region24: #{tpu_custom_call.1} parent=19 // pred_fallthru
        _
      // Predicated region
      $region25: #{tpu_custom_call.1} parent=19 // pred_check
        %p195 = pneg %p73
      $region26: #{tpu_custom_call.1} parent=19 // pred_check_branch
        %197 = sbr.rel (%p195) target = $region28
      $region27: #{tpu_custom_call.1} parent=19 // pred_region
        %p198 = scmp.lt.s32.totalorder %s18, 1
        %s199 = scalar_select %p198, %s18, 1
        %p200 = scmp.lt.s32.totalorder %s19, 1
        %s201 = scalar_select %p200, %s19, 1
        %s202 = smul.addr %s199, 2
        %s203 = sadd.s32 %s201, %s202
        %s204 = smul.addr %s203, 8
        %s205 = scalar_lea.vmem %s1, %s204
      $region28: #{tpu_custom_call.1} parent=19 // pred_fallthru
        _
    $region20: #{tpu_custom_call.1} parent=5 // pred_fallthru
      _
    %p206 = scmp.le.s32.totalorder 1, %s11
    %p207 = scmp.lt.s32.totalorder %s11, 5
    %p208 = pnand %p206, %p207
    %p209 = pneg %p208
    // Predicated region
    $region29: #{tpu_custom_call.1} parent=5 // pred_check
      _
    $region30: #{tpu_custom_call.1} parent=5 // pred_check_branch
      %211 = sbr.rel (%p208) target = $region32
    $region31: #{tpu_custom_call.1} parent=5 // pred_region
      %s212 = ssub.s32 %s11, 1
      %s213 = smul.u32 4, %s21
      %p214 = scmp.lt.s32.totalorder %s20, 1
      %s215 = scalar_select %p214, %s20, 1
      %p216 = scmp.lt.s32.totalorder %s213, 7
      %s217 = scalar_select %p216, %s213, 7
      %s218 = smul.addr %s215, 8
      %s219 = sadd.s32 %s217, %s218
      %s220 = smul.addr %s219, 8
      %s221 = scalar_lea.vmem %s0, %s220
      %p222 = pneg %p51
      %p223 = pneg %p48
      %p224 = scmp.lt.s32.totalorder %s20, 1
      %s225 = scalar_select %p224, %s20, 1
      %p226 = scmp.lt.s32.totalorder %s21, 1
      %s227 = scalar_select %p226, %s21, 1
      %s228 = smul.addr %s225, 2
      %s229 = sadd.s32 %s227, %s228
      %s230 = smul.addr %s229, 8
      %s231 = scalar_lea.vmem %s1, %s230
      %p232 = pneg %p79
      %p233 = pneg %p76
      %p234 = pneg %p100
      %p235 = pneg %p97
      %p236 = pneg %p130
      %p237 = pneg %p127
      %s238 = smul.u32 %s20, 2
      %s239 = sadd.s32 %s238, %s21
      %s240 = smul.u32 4, %s239
      %p241 = scmp.lt.s32.totalorder %s240, 15
      %s242 = scalar_select %p241, %s240, 15
      %s243 = smul.addr %s242, 8
      %s244 = scalar_lea.vmem %s3, %s243
      %p245 = pneg %p160
      %p246 = pneg %p157
      %s247 = smul.u32 %s20, 2
      %s248 = sadd.s32 %s247, %s21
      %p249 = scmp.lt.s32.totalorder %s248, 3
      %s250 = scalar_select %p249, %s248, 3
      %s251 = smul.addr %s250, 8
      %s252 = scalar_lea.vmem %s4, %s251
      %s253 = smul.u32 4, %s21
      %p254 = scmp.lt.s32.totalorder %s20, 1
      %s255 = scalar_select %p254, %s20, 1
      %p256 = scmp.lt.s32.totalorder %s253, 7
      %s257 = scalar_select %p256, %s253, 7
      %s258 = smul.addr %s255, 8
      %s259 = sadd.s32 %s257, %s258
      %s260 = smul.addr %s259, 8
      %s261 = scalar_lea.vmem %s0, %s260
      %s262 = smul.u32 4, %s21
      %p263 = scmp.lt.s32.totalorder %s20, 1
      %s264 = scalar_select %p263, %s20, 1
      %p265 = scmp.lt.s32.totalorder %s21, 1
      %s266 = scalar_select %p265, %s21, 1
      %s267 = smul.addr %s264, 2
      %s268 = sadd.s32 %s266, %s267
      %s269 = smul.addr %s268, 8
      %s270 = scalar_lea.vmem %s1, %s269
      %s271 = smul.u32 %s20, 2
      %s272 = sadd.s32 %s271, %s21
      %s273 = smul.u32 4, %s272
      %p274 = scmp.lt.s32.totalorder %s273, 15
      %s275 = scalar_select %p274, %s273, 15
      %s276 = smul.addr %s275, 8
      %s277 = scalar_lea.vmem %s3, %s276
      %s278 = smul.u32 %s20, 2
      %s279 = sadd.s32 %s278, %s21
      %s280 = smul.u32 4, %s279
      %s281 = smul.u32 %s20, 2
      %s282 = sadd.s32 %s281, %s21
      %p283 = scmp.lt.s32.totalorder %s282, 3
      %s284 = scalar_select %p283, %s282, 3
      %s285 = smul.addr %s284, 8
      %s286 = scalar_lea.vmem %s4, %s285
      %s287 = smul.u32 %s20, 2
      %s288 = sadd.s32 %s287, %s21
      %v289 = vld [vmem:[%s261] sm:$0xff]
      %v290 = vld [vmem:[%s261 + $0x8] sm:$0xff]
      %v291 = vld [vmem:[%s261 + $0x10] sm:$0xff]
      %v292 = vld [vmem:[%s261 + $0x18] sm:$0xff]
      %v293 = vld [vmem:[%s2] sm:$0xff]
      %v294 = vld [vmem:[%s2 + $0x8] sm:$0xff]
      %v295 = vld [vmem:[%s2 + $0x10] sm:$0xff]
      %vm296 = vcmask 195584
      %v298 = vsel %vm296, %v289, 0
      %v301 = vsel %vm296, %v290, 0
      %v304 = vsel %vm296, %v291, 0
      %v307 = vsel %vm296, %v292, 0
      %309 = vmatprep.subr.mxu0 0.0
      %310 = vmatpush1.msra.mxu0 %v293
      %311 = vmatprep.subr.mxu0 0.0
      %312 = vmatpush1.msra.mxu0 %v294
      %313 = vmatprep.subr.mxu0 0.0
      %314 = vmatpush1.msra.mxu0 %v295
      %315 = vmatprep.subr.mxu0 0.0
      %316 = vmatpush1.msra.mxu0 0.0
      %317 = vmatprep.subr.mxu0 0.0
      %318 = vmatpush1.msra.mxu0 0.0
      %319 = vmatprep.subr.mxu0 0.0
      %320 = vmatpush1.msra.mxu0 0.0
      %321 = vmatprep.subr.mxu0 0.0
      %322 = vmatpush1.msra.mxu0 0.0
      %323 = vmatprep.subr.mxu0 0.0
      %324 = vmatpush1.msra.mxu0 0.0
      %325 = vmatprep.subr.mxu0 0.0
      %326 = vmatpush1.msra.mxu0 0.0
      %327 = vmatprep.subr.mxu0 0.0
      %328 = vmatpush1.msra.mxu0 0.0
      %329 = vmatprep.subr.mxu0 0.0
      %330 = vmatpush1.msra.mxu0 0.0
      %331 = vmatprep.subr.mxu0 0.0
      %332 = vmatpush1.msra.mxu0 0.0
      %333 = vmatprep.subr.mxu0 0.0
      %334 = vmatpush1.msra.mxu0 0.0
      %335 = vmatprep.subr.mxu0 0.0
      %336 = vmatpush1.msra.mxu0 0.0
      %337 = vmatprep.subr.mxu0 0.0
      %338 = vmatpush1.msra.mxu0 0.0
      %339 = vmatprep.subr.mxu0 0.0
      %340 = vmatpush1.msra.mxu0 0.0
      %341 = vmatprep.subr.mxu0 0.0
      %342 = vmatpush1.msra.mxu0 0.0
      %343 = vmatprep.subr.mxu0 0.0
      %344 = vmatpush1.msra.mxu0 0.0
      %345 = vmatprep.subr.mxu0 0.0
      %346 = vmatpush1.msra.mxu0 0.0
      %347 = vmatprep.subr.mxu0 0.0
      %348 = vmatpush1.msra.mxu0 0.0
      %349 = vmatprep.subr.mxu0 0.0
      %350 = vmatpush1.msra.mxu0 0.0
      %351 = vmatprep.subr.mxu0 0.0
      %352 = vmatpush1.msra.mxu0 0.0
      %353 = vmatprep.subr.mxu0 0.0
      %354 = vmatpush1.msra.mxu0 0.0
      %355 = vmatprep.subr.mxu0 0.0
      %356 = vmatpush1.msra.mxu0 0.0
      %357 = vmatprep.subr.mxu0 0.0
      %358 = vmatpush1.msra.mxu0 0.0
      %359 = vmatprep.subr.mxu0 0.0
      %360 = vmatpush1.msra.mxu0 0.0
      %361 = vmatprep.subr.mxu0 0.0
      %362 = vmatpush1.msra.mxu0 0.0
      %363 = vmatprep.subr.mxu0 0.0
      %364 = vmatpush1.msra.mxu0 0.0
      %365 = vmatprep.subr.mxu0 0.0
      %366 = vmatpush1.msra.mxu0 0.0
      %367 = vmatprep.subr.mxu0 0.0
      %368 = vmatpush1.msra.mxu0 0.0
      %369 = vmatprep.subr.mxu0 0.0
      %370 = vmatpush1.msra.mxu0 0.0
      %371 = vmatprep.subr.mxu0 0.0
      %372 = vmatpush1.msra.mxu0 0.0
      %373 = vmatprep.mubr.f32.mxu0 0.0
      %374 = vmatmul.mubr.f32.gmra.mrb[0].mxu0 %v298
      %v375 = vpop.f32.mrb[0].mxu0
      %v376 = vadd.f32 0.0, %v375
      %v377 = vpop.f32.mrb[0].mxu0
      %378 = vmatprep.mubr.f32.mxu0 0.0
      %379 = vmatmul.mubr.f32.gmra.mrb[0].mxu0 %v301
      %v380 = vpop.f32.mrb[0].mxu0
      %v381 = vadd.f32 0.0, %v380
      %v382 = vpop.f32.mrb[0].mxu0
      %383 = vmatprep.mubr.f32.mxu0 0.0
      %384 = vmatmul.mubr.f32.gmra.mrb[0].mxu0 %v304
      %v385 = vpop.f32.mrb[0].mxu0
      %v386 = vadd.f32 0.0, %v385
      %v387 = vpop.f32.mrb[0].mxu0
      %388 = vmatprep.mubr.f32.mxu0 0.0
      %389 = vmatmul.mubr.f32.gmra.mrb[0].mxu0 %v307
      %v390 = vpop.f32.mrb[0].mxu0
      %v391 = vadd.f32 0.0, %v390
      %v392 = vpop.f32.mrb[0].mxu0
      %393 = vdwg.mxu0
      %vm394 = vcmask 64512
      %395 = vst.msk [vmem:[#allocation2] sm:$0xff] %vm394, %v376
      %396 = vst.msk [vmem:[#allocation2 + $0x8] sm:$0xff] %vm394, %v381
      %397 = vst.msk [vmem:[#allocation2 + $0x10] sm:$0xff] %vm394, %v386
      %398 = vst.msk [vmem:[#allocation2 + $0x18] sm:$0xff] %vm394, %v391
      %v399 = vld [vmem:[#allocation2] sm:$0xff]
      %v400 = vld [vmem:[#allocation2 + $0x8] sm:$0xff]
      %v401 = vld [vmem:[#allocation2 + $0x10] sm:$0xff]
      %v402 = vld [vmem:[%s261 + $0x8] sm:$0xff]
      %v403 = vld [vmem:[%s261 + $0x10] sm:$0xff]
      %v404 = vld [vmem:[%s261 + $0x18] sm:$0xff]
      %s405 = scalar_lea.vmem %s2, 24
      %v406 = vld [vmem:[%s405] sm:$0xff]
      %v407 = vld [vmem:[%s405 + $0x8] sm:$0xff]
      %v408 = vld [vmem:[%s405 + $0x10] sm:$0xff]
      %v410 = vsel %vm296, %v402, 0
      %v413 = vsel %vm296, %v403, 0
      %v416 = vsel %vm296, %v404, 0
      %418 = vmatprep.subr.mxu0 0.0
      %419 = vmatpush1.msra.mxu0 %v406
      %420 = vmatprep.subr.mxu0 0.0
      %421 = vmatpush1.msra.mxu0 %v407
      %422 = vmatprep.subr.mxu0 0.0
      %423 = vmatpush1.msra.mxu0 %v408
      %424 = vmatprep.subr.mxu0 0.0
      %425 = vmatpush1.msra.mxu0 0.0
      %426 = vmatprep.subr.mxu0 0.0
      %427 = vmatpush1.msra.mxu0 0.0
      %428 = vmatprep.subr.mxu0 0.0
      %429 = vmatpush1.msra.mxu0 0.0
      %430 = vmatprep.subr.mxu0 0.0
      %431 = vmatpush1.msra.mxu0 0.0
      %432 = vmatprep.subr.mxu0 0.0
      %433 = vmatpush1.msra.mxu0 0.0
      %434 = vmatprep.subr.mxu0 0.0
      %435 = vmatpush1.msra.mxu0 0.0
      %436 = vmatprep.subr.mxu0 0.0
      %437 = vmatpush1.msra.mxu0 0.0
      %438 = vmatprep.subr.mxu0 0.0
      %439 = vmatpush1.msra.mxu0 0.0
      %440 = vmatprep.subr.mxu0 0.0
      %441 = vmatpush1.msra.mxu0 0.0
      %442 = vmatprep.subr.mxu0 0.0
      %443 = vmatpush1.msra.mxu0 0.0
      %444 = vmatprep.subr.mxu0 0.0
      %445 = vmatpush1.msra.mxu0 0.0
      %446 = vmatprep.subr.mxu0 0.0
      %447 = vmatpush1.msra.mxu0 0.0
      %448 = vmatprep.subr.mxu0 0.0
      %449 = vmatpush1.msra.mxu0 0.0
      %450 = vmatprep.subr.mxu0 0.0
      %451 = vmatpush1.msra.mxu0 0.0
      %452 = vmatprep.subr.mxu0 0.0
      %453 = vmatpush1.msra.mxu0 0.0
      %454 = vmatprep.subr.mxu0 0.0
      %455 = vmatpush1.msra.mxu0 0.0
      %456 = vmatprep.subr.mxu0 0.0
      %457 = vmatpush1.msra.mxu0 0.0
      %458 = vmatprep.subr.mxu0 0.0
      %459 = vmatpush1.msra.mxu0 0.0
      %460 = vmatprep.subr.mxu0 0.0
      %461 = vmatpush1.msra.mxu0 0.0
      %462 = vmatprep.subr.mxu0 0.0
      %463 = vmatpush1.msra.mxu0 0.0
      %464 = vmatprep.subr.mxu0 0.0
      %465 = vmatpush1.msra.mxu0 0.0
      %466 = vmatprep.subr.mxu0 0.0
      %467 = vmatpush1.msra.mxu0 0.0
      %468 = vmatprep.subr.mxu0 0.0
      %469 = vmatpush1.msra.mxu0 0.0
      %470 = vmatprep.subr.mxu0 0.0
      %471 = vmatpush1.msra.mxu0 0.0
      %472 = vmatprep.subr.mxu0 0.0
      %473 = vmatpush1.msra.mxu0 0.0
      %474 = vmatprep.subr.mxu0 0.0
      %475 = vmatpush1.msra.mxu0 0.0
      %476 = vmatprep.subr.mxu0 0.0
      %477 = vmatpush1.msra.mxu0 0.0
      %478 = vmatprep.subr.mxu0 0.0
      %479 = vmatpush1.msra.mxu0 0.0
      %480 = vmatprep.subr.mxu0 0.0
      %481 = vmatpush1.msra.mxu0 0.0
      %482 = vmatprep.mubr.f32.mxu0 0.0
      %483 = vmatmul.mubr.f32.gmra.mrb[0].mxu0 %v410
      %v484 = vpop.f32.mrb[0].mxu0
      %v485 = vadd.f32 0.0, %v484
      %v486 = vpop.f32.mrb[0].mxu0
      %487 = vmatprep.mubr.f32.mxu0 0.0
      %488 = vmatmul.mubr.f32.gmra.mrb[0].mxu0 %v413
      %v489 = vpop.f32.mrb[0].mxu0
      %v490 = vadd.f32 0.0, %v489
      %v491 = vpop.f32.mrb[0].mxu0
      %492 = vmatprep.mubr.f32.mxu0 0.0
      %493 = vmatmul.mubr.f32.gmra.mrb[0].mxu0 %v416
      %v494 = vpop.f32.mrb[0].mxu0
      %v495 = vadd.f32 0.0, %v494
      %v496 = vpop.f32.mrb[0].mxu0
      %497 = vdwg.mxu0
      %v498 = vadd.f32 %v399, %v485
      %v499 = vadd.f32 %v400, %v490
      %v500 = vadd.f32 %v401, %v495
      %501 = vst.msk [vmem:[#allocation2] sm:$0xff] %vm394, %v498
      %502 = vst.msk [vmem:[#allocation2 + $0x8] sm:$0xff] %vm394, %v499
      %503 = vst.msk [vmem:[#allocation2 + $0x10] sm:$0xff] %vm394, %v500
      %v504 = vld [vmem:[#allocation2 + $0x18] sm:$0xff]
      %v505 = vld [vmem:[%s270] sm:$0xff]
      %v506 = vld [vmem:[%s405] sm:$0xff]
      %v507 = vld [vmem:[%s405 + $0x8] sm:$0xff]
      %v508 = vld [vmem:[%s405 + $0x10] sm:$0xff]
      %v510 = vsel %vm296, %v505, 0
      %512 = vmatprep.subr.mxu0 0.0
      %513 = vmatpush1.msra.mxu0 %v506
      %514 = vmatprep.subr.mxu0 0.0
      %515 = vmatpush1.msra.mxu0 %v507
      %516 = vmatprep.subr.mxu0 0.0
      %517 = vmatpush1.msra.mxu0 %v508
      %518 = vmatprep.subr.mxu0 0.0
      %519 = vmatpush1.msra.mxu0 0.0
      %520 = vmatprep.subr.mxu0 0.0
      %521 = vmatpush1.msra.mxu0 0.0
      %522 = vmatprep.subr.mxu0 0.0
      %523 = vmatpush1.msra.mxu0 0.0
      %524 = vmatprep.subr.mxu0 0.0
      %525 = vmatpush1.msra.mxu0 0.0
      %526 = vmatprep.subr.mxu0 0.0
      %527 = vmatpush1.msra.mxu0 0.0
      %528 = vmatprep.subr.mxu0 0.0
      %529 = vmatpush1.msra.mxu0 0.0
      %530 = vmatprep.subr.mxu0 0.0
      %531 = vmatpush1.msra.mxu0 0.0
      %532 = vmatprep.subr.mxu0 0.0
      %533 = vmatpush1.msra.mxu0 0.0
      %534 = vmatprep.subr.mxu0 0.0
      %535 = vmatpush1.msra.mxu0 0.0
      %536 = vmatprep.subr.mxu0 0.0
      %537 = vmatpush1.msra.mxu0 0.0
      %538 = vmatprep.subr.mxu0 0.0
      %539 = vmatpush1.msra.mxu0 0.0
      %540 = vmatprep.subr.mxu0 0.0
      %541 = vmatpush1.msra.mxu0 0.0
      %542 = vmatprep.subr.mxu0 0.0
      %543 = vmatpush1.msra.mxu0 0.0
      %544 = vmatprep.subr.mxu0 0.0
      %545 = vmatpush1.msra.mxu0 0.0
      %546 = vmatprep.subr.mxu0 0.0
      %547 = vmatpush1.msra.mxu0 0.0
      %548 = vmatprep.subr.mxu0 0.0
      %549 = vmatpush1.msra.mxu0 0.0
      %550 = vmatprep.subr.mxu0 0.0
      %551 = vmatpush1.msra.mxu0 0.0
      %552 = vmatprep.subr.mxu0 0.0
      %553 = vmatpush1.msra.mxu0 0.0
      %554 = vmatprep.subr.mxu0 0.0
      %555 = vmatpush1.msra.mxu0 0.0
      %556 = vmatprep.subr.mxu0 0.0
      %557 = vmatpush1.msra.mxu0 0.0
      %558 = vmatprep.subr.mxu0 0.0
      %559 = vmatpush1.msra.mxu0 0.0
      %560 = vmatprep.subr.mxu0 0.0
      %561 = vmatpush1.msra.mxu0 0.0
      %562 = vmatprep.subr.mxu0 0.0
      %563 = vmatpush1.msra.mxu0 0.0
      %564 = vmatprep.subr.mxu0 0.0
      %565 = vmatpush1.msra.mxu0 0.0
      %566 = vmatprep.subr.mxu0 0.0
      %567 = vmatpush1.msra.mxu0 0.0
      %568 = vmatprep.subr.mxu0 0.0
      %569 = vmatpush1.msra.mxu0 0.0
      %570 = vmatprep.subr.mxu0 0.0
      %571 = vmatpush1.msra.mxu0 0.0
      %572 = vmatprep.subr.mxu0 0.0
      %573 = vmatpush1.msra.mxu0 0.0
      %574 = vmatprep.subr.mxu0 0.0
      %575 = vmatpush1.msra.mxu0 0.0
      %576 = vmatprep.mubr.f32.mxu0 0.0
      %577 = vmatmul.mubr.f32.gmra.mrb[0].mxu0 %v510
      %v578 = vpop.f32.mrb[0].mxu0
      %v579 = vadd.f32 0.0, %v578
      %v580 = vpop.f32.mrb[0].mxu0
      %581 = vdwg.mxu0
      %v582 = vadd.f32 %v504, %v579
      %583 = vst.msk [vmem:[#allocation2 + $0x18] sm:$0xff] %vm394, %v582
      %v584 = vld [vmem:[#allocation2] sm:$0xff]
      %v585 = vld [vmem:[#allocation2 + $0x8] sm:$0xff]
      %v586 = vld [vmem:[#allocation2 + $0x10] sm:$0xff]
      %v587 = vld [vmem:[#allocation2 + $0x18] sm:$0xff]
      %588 = vst.msk [vmem:[%s277] sm:$0xff] %vm394, %v584
      %589 = vst.msk [vmem:[%s277 + $0x8] sm:$0xff] %vm394, %v585
      %590 = vst.msk [vmem:[%s277 + $0x10] sm:$0xff] %vm394, %v586
      %591 = vst.msk [vmem:[%s277 + $0x18] sm:$0xff] %vm394, %v587
      %v592 = vsel %vm394, %v584, 0.0
      %v593 = vsel %vm394, %v585, 0.0
      %v594 = vadd.f32 %v592, %v593
      %v595 = vsel %vm394, %v586, 0.0
      %v596 = vadd.f32 %v594, %v595
      %v597 = vsel %vm394, %v587, 0.0
      %v598 = vadd.f32 %v596, %v597
      %v599 = vrot.slane %v598, 4
      %v600 = vadd.f32 %v598, %v599
      %v601 = vrot.slane %v600, 2
      %v602 = vadd.f32 %v600, %v601
      %v603 = vrot.slane %v602, 1
      %v604 = vadd.f32 %v602, %v603
      %v605 = vmul.f32 %v584, %v584
      %v606 = vmul.f32 %v585, %v585
      %v607 = vmul.f32 %v586, %v586
      %v608 = vmul.f32 %v587, %v587
      %v609 = vsel %vm394, %v605, 0.0
      %v610 = vsel %vm394, %v606, 0.0
      %v611 = vadd.f32 %v609, %v610
      %v612 = vsel %vm394, %v607, 0.0
      %v613 = vadd.f32 %v611, %v612
      %v614 = vsel %vm394, %v608, 0.0
      %v615 = vadd.f32 %v613, %v614
      %v616 = vrot.slane %v615, 4
      %v617 = vadd.f32 %v615, %v616
      %v618 = vrot.slane %v617, 2
      %v619 = vadd.f32 %v617, %v618
      %v620 = vrot.slane %v619, 1
      %v621 = vadd.f32 %v619, %v620
      %v622 = vlaneseq
      %v623 = vshrl.u32 %v622, 7
      %vm624 = vcmp.eq.s32.totalorder %v623, 0
      %vm625 = vcmp.eq.s32.totalorder %v623, 1
      %v626 = vsel %vm625, %v621, 0.0
      %v627 = vsel %vm624, %v604, %v626
      %628 = vst.msk [vmem:[%s286] sm:$0xff] %vm394, %v627
      %s629 = smul.u32 %s20, 2
      %s630 = sadd.s32 %s629, %s21
      %s631 = smul.u32 4, %s630
      %p632 = scmp.lt.s32.totalorder %s631, 15
      %s633 = scalar_select %p632, %s631, 15
      %s634 = smul.addr %s633, 8
      %s635 = scalar_lea.vmem %s3, %s634
      %s636 = smul.u32 %s20, 2
      %s637 = sadd.s32 %s636, %s21
      %p638 = scmp.lt.s32.totalorder %s637, 3
      %s639 = scalar_select %p638, %s637, 3
      %s640 = smul.addr %s639, 8
      %s641 = scalar_lea.vmem %s4, %s640
      // Predicated region
      $region33: #{tpu_custom_call.1} parent=31 // pred_check
        %p642 = pneg %p127
      $region34: #{tpu_custom_call.1} parent=31 // pred_check_branch
        %644 = sbr.rel (%p642) target = $region36
      $region35: #{tpu_custom_call.1} parent=31 // pred_region
        %s645 = smul.u32 %s20, 2
        %s646 = sadd.s32 %s645, %s21
        %s647 = smul.u32 4, %s646
      $region36: #{tpu_custom_call.1} parent=31 // pred_fallthru
        _
      // Predicated region
      $region37: #{tpu_custom_call.1} parent=31 // pred_check
        %p648 = pneg %p157
      $region38: #{tpu_custom_call.1} parent=31 // pred_check_branch
        %650 = sbr.rel (%p648) target = $region40
      $region39: #{tpu_custom_call.1} parent=31 // pred_region
        %s651 = smul.u32 %s20, 2
        %s652 = sadd.s32 %s651, %s21
      $region40: #{tpu_custom_call.1} parent=31 // pred_fallthru
        _
    $region32: #{tpu_custom_call.1} parent=5 // pred_fallthru
      _
    %p653 = scmp.le.s32.totalorder 2, %s11
    // Predicated region
    $region41: #{tpu_custom_call.1} parent=5 // pred_check
      %p654 = pneg %p653
    $region42: #{tpu_custom_call.1} parent=5 // pred_check_branch
      %656 = sbr.rel (%p654) target = $region44
    $region43: #{tpu_custom_call.1} parent=5 // pred_region
      %s657 = ssub.s32 %s11, 2
      // Predicated region
      $region45: #{tpu_custom_call.1} parent=43 // pred_check
        %p658 = pneg %p133
      $region46: #{tpu_custom_call.1} parent=43 // pred_check_branch
        %660 = sbr.rel (%p658) target = $region48
      $region47: #{tpu_custom_call.1} parent=43 // pred_region
        %s661 = smul.u32 %s22, 2
        %s662 = sadd.s32 %s661, %s23
        %s663 = smul.u32 4, %s662
        %p664 = scmp.lt.s32.totalorder %s663, 15
        %s665 = scalar_select %p664, %s663, 15
        %s666 = smul.addr %s665, 8
        %s667 = scalar_lea.vmem %s3, %s666
      $region48: #{tpu_custom_call.1} parent=43 // pred_fallthru
        _
      // Predicated region
      $region49: #{tpu_custom_call.1} parent=43 // pred_check
        %p668 = pneg %p163
      $region50: #{tpu_custom_call.1} parent=43 // pred_check_branch
        %670 = sbr.rel (%p668) target = $region52
      $region51: #{tpu_custom_call.1} parent=43 // pred_region
        %s671 = smul.u32 %s22, 2
        %s672 = sadd.s32 %s671, %s23
        %p673 = scmp.lt.s32.totalorder %s672, 3
        %s674 = scalar_select %p673, %s672, 3
        %s675 = smul.addr %s674, 8
        %s676 = scalar_lea.vmem %s4, %s675
      $region52: #{tpu_custom_call.1} parent=43 // pred_fallthru
        _
    $region44: #{tpu_custom_call.1} parent=5 // pred_fallthru
      _
  $region6: #{tpu_custom_call.1} parent=0 // loop_footer
    %s15 = sadd.s32 1, %s11
  $region7: #{tpu_custom_call.1} parent=0 // loop_footer_branch
    %10 = sbr.rel target = $region3
  $region8: #{tpu_custom_call.1} parent=0 // loop_exit
    _

</llo_original>
